<compile_context>
chip_gen: v6e
topology: v6e:2x2x1
jax: 0.10.0
libtpu: 0.0.40
codegen_flags: <defaults>
</compile_context>

<pallas_src>
import jax
import jax.numpy as jnp
from jax import lax
from jax.experimental import pallas as pl
from jax.experimental.pallas import tpu as pltpu


def lstm_classifier_kernel(x_ref,       # ((T+1)*Bp, I)  bf16, time-major, last block zeros
                           w_ih0p_ref,  # (I, 8H)        bf16, layer-0 cols only (packed)
                           base_ref,    # (1, 8H)        f32,  [b1 | b0] packed per gate
                           wc_ref,      # (2H, 8H)       bf16, fused recurrent weights
                           w_fc_ref,    # (1, 2H)        f32,  [w_fc | 0]
                           b_fc_ref,    # (1, 1)         f32
                           out_ref,     # (Bp, 1)        f32
                           addend_ref): # VMEM scratch ((T+1)*Bp, 8H) f32
    TB1 = x_ref.shape[0]
    Bp = out_ref.shape[0]
    T = TB1 // Bp - 1
    H2 = wc_ref.shape[0]                 # 2H  (one packed [h1|h0] block)
    H8 = wc_ref.shape[1]                 # 8H  (four packed gate blocks)
    H = H2 // 2

    # --- Hoisted layer-0 input projection (all timesteps + 1 dummy block): one MXU pass.
    #     addend(t) = [b1 | x(t)@W_ih0 + b0] laid out in the packed gate-column order.
    addend_ref[...] = (jnp.dot(x_ref[...], w_ih0p_ref[...],
                               preferred_element_type=jnp.float32)
                       + base_ref[...])

    wc = wc_ref[...]

    # --- Hoisted full-vreg activation masks: g-gates occupy lanes [2*H2, 3*H2). ---
    lane = lax.broadcasted_iota(jnp.int32, (Bp, H8), 1)
    g_mask = (lane >= 2 * H2) & (lane < 3 * H2)
    pre_scale = jnp.where(g_mask, jnp.float32(1.0), jnp.float32(0.5))
    post_shift = jnp.where(g_mask, jnp.float32(0.0), jnp.float32(0.5))

    def activate(gates):                 # (Bp, 8H) -> (Bp, 8H); sigmoid on i/f/o, tanh on g
        t = jnp.tanh(gates * pre_scale)
        return t * pre_scale + post_shift

    def combine(act, c):                 # packed combine for both layers at once
        i_p = act[:, 0 * H2:1 * H2]      # slices land on vreg boundaries (H2 = 128 lanes)
        f_p = act[:, 1 * H2:2 * H2]
        g_p = act[:, 2 * H2:3 * H2]
        o_p = act[:, 3 * H2:4 * H2]
        c_new = f_p * c + i_p * g_p
        h_new = o_p * jnp.tanh(c_new)
        return h_new, c_new

    # --- Prologue: layer-0 step 0 needs no matmul (h(-1)=c(-1)=0). Run the packed combine
    #     on addend block 0 and zero the layer-1 half with a hoisted lane mask. ---
    zeros2 = jnp.zeros((Bp, H2), jnp.float32)
    h_p, c_p = combine(activate(addend_ref[pl.ds(0, Bp), :]), zeros2)
    keep0 = lax.broadcasted_iota(jnp.int32, (Bp, H2), 1) >= H     # layer-0 lanes
    h_p = jnp.where(keep0, h_p, 0.0)
    c_p = jnp.where(keep0, c_p, 0.0)

    # --- Skewed recurrence: iteration k maps [h1(k-1) | h0(k)] -> [h1(k) | h0(k+1)]
    #     with a single MXU push per step. ---
    def step(k, carry):
        h_p, c_p = carry
        row = pl.multiple_of((k + 1) * Bp, Bp)
        addend = addend_ref[pl.ds(row, Bp), :]                    # (Bp, 8H)
        gates = jnp.dot(h_p.astype(jnp.bfloat16), wc,
                        preferred_element_type=jnp.float32) + addend
        return combine(activate(gates), c_p)

    h_p, c_p = lax.fori_loop(0, T, step, (h_p, c_p),
                             unroll=True if T <= 16 else 8)

    # --- fc(hidden[-1]) -> sigmoid: lane-reduce over the layer-1 half (w_fc zero-padded
    #     on layer-0 lanes), no wasted N=1 MXU pass. ---
    logits = jnp.sum(h_p * w_fc_ref[...], axis=-1, keepdims=True) + b_fc_ref[...]
    out_ref[...] = 0.5 * jnp.tanh(0.5 * logits) + 0.5


def hockey_lstm_classifier(x, params):
    """x: (B, T, I) float32 (batch_first, like the PyTorch module)."""
    B, T, I = x.shape
    H = params["w_hh0"].shape[1]                      # torch w_hh is (4H, H)

    # Pad batch to the f32 sublane height so per-step vregs/matmul rows are full.
    # (For real workloads, grow Bp toward MXU row height and batch sequences together.)
    Bp = max(8, ((B + 7) // 8) * 8)
    if Bp != B:
        x = jnp.pad(x, ((0, Bp - B), (0, 0), (0, 0)))

    def pack_cols(layer1_mat, layer0_mat):
        # (rows, 4H) x2 in torch gate order [i|f|g|o] -> (rows, 8H) packed
        # [i1|i0|f1|f0|g1|g0|o1|o0] so layer-1/layer-0 halves share lane offsets.
        rows = layer1_mat.shape[0]
        l1 = layer1_mat.reshape(rows, 4, H)
        l0 = layer0_mat.reshape(rows, 4, H)
        return jnp.stack([l1, l0], axis=2).reshape(rows, 8 * H)

    # Fused recurrent weight: rows 0:H multiply h1, rows H:2H multiply h0.
    w_hh0_t = params["w_hh0"].T                       # (H, 4H)
    w_ih1_t = params["w_ih1"].T                       # (H, 4H)
    w_hh1_t = params["w_hh1"].T                       # (H, 4H)
    wc = jnp.concatenate([pack_cols(w_hh1_t, jnp.zeros_like(w_hh0_t)),
                          pack_cols(w_ih1_t, w_hh0_t)], axis=0)          # (2H, 8H)

    # Hoisted input projection weight (layer-0 columns only) and fused biases.
    w_ih0p = pack_cols(jnp.zeros((I, 4 * H), jnp.float32), params["w_ih0"].T)   # (I, 8H)
    b0 = (params["b_ih0"] + params["b_hh0"]).reshape(1, 4 * H)
    b1 = (params["b_ih1"] + params["b_hh1"]).reshape(1, 4 * H)
    base = pack_cols(b1, b0)                                                     # (1, 8H)

    # FC weight padded to the packed state width: layer-1 lanes carry w_fc, layer-0 zero.
    w_fc_p = jnp.concatenate([params["w_fc"].reshape(1, H),
                              jnp.zeros((1, H), jnp.float32)], axis=1)           # (1, 2H)
    b_fc = params["b_fc"].reshape(1, 1)

    # Time-major flattened input + one dummy zero time block (keeps the skewed loop
    # uniform); bf16 MXU operands with f32 accumulation in-kernel.
    x_flat = jnp.transpose(x, (1, 0, 2)).reshape(T * Bp, I)
    x_flat = jnp.concatenate([x_flat, jnp.zeros((Bp, I), x_flat.dtype)], axis=0)
    x_flat = x_flat.astype(jnp.bfloat16)
    w_ih0p = w_ih0p.astype(jnp.bfloat16)
    wc = wc.astype(jnp.bfloat16)

    # TODO(synk): for production T/B, (a) stream x / the addend scratch over time chunks
    # (pltpu.emit_pipeline) so scratch stays under v7x's 64 MiB VMEM, and (b) add a
    # parallel batch-block grid axis (dimension_semantics=("parallel",)) so both v7x
    # TensorCores get work; unnecessary at these toy sizes.
    vmem = pl.BlockSpec(memory_space=pltpu.MemorySpace.VMEM)
    out = pl.pallas_call(
        lstm_classifier_kernel,
        out_shape=jax.ShapeDtypeStruct((Bp, 1), jnp.float32),
        in_specs=[vmem] * 6,
        out_specs=vmem,
        scratch_shapes=[pltpu.VMEM(((T + 1) * Bp, 8 * H), jnp.float32)],
    )(x_flat, w_ih0p, base, wc, w_fc_p, b_fc)
    return out[:B]


def reference_forward(x, params):
    """Pure-JAX f32 reference matching torch.nn.LSTM(num_layers=2, batch_first=True)."""
    B, T, I = x.shape
    H = params["w_hh0"].shape[1]

    def cell(x_t, h, c, w_ih, w_hh, b_ih, b_hh):
        gates = x_t @ w_ih.T + b_ih + h @ w_hh.T + b_hh
        i_g = jax.nn.sigmoid(gates[:, 0 * H:1 * H])
        f_g = jax.nn.sigmoid(gates[:, 1 * H:2 * H])
        g_g = jnp.tanh(gates[:, 2 * H:3 * H])
        o_g = jax.nn.sigmoid(gates[:, 3 * H:4 * H])
        c = f_g * c + i_g * g_g
        h = o_g * jnp.tanh(c)
        return h, c

    h0 = c0 = h1 = c1 = jnp.zeros((B, H), jnp.float32)
    for t in range(T):
        x_t = x[:, t, :]
        h0, c0 = cell(x_t, h0, c0, params["w_ih0"], params["w_hh0"],
                      params["b_ih0"], params["b_hh0"])
        h1, c1 = cell(h0, h1, c1, params["w_ih1"], params["w_hh1"],
                      params["b_ih1"], params["b_hh1"])
    logits = h1 @ params["w_fc"].T + params["b_fc"]
    return jax.nn.sigmoid(logits)


def init_params(key, input_size, hidden_size):
    """Deterministic init mirroring PyTorch's U(-1/sqrt(H), 1/sqrt(H)) shapes."""
    k = 1.0 / jnp.sqrt(hidden_size)
    names_shapes = [
        ("w_ih0", (4 * hidden_size, input_size)),
        ("w_hh0", (4 * hidden_size, hidden_size)),
        ("b_ih0", (4 * hidden_size,)),
        ("b_hh0", (4 * hidden_size,)),
        ("w_ih1", (4 * hidden_size, hidden_size)),
        ("w_hh1", (4 * hidden_size, hidden_size)),
        ("b_ih1", (4 * hidden_size,)),
        ("b_hh1", (4 * hidden_size,)),
        ("w_fc", (1, hidden_size)),
        ("b_fc", (1,)),
    ]
    params = {}
    keys = jax.random.split(key, len(names_shapes))
    for sub, (name, shape) in zip(keys, names_shapes):
        params[name] = jax.random.uniform(sub, shape, jnp.float32, -k, k)
    return params


if __name__ == "__main__":
    # Module uses hidden_size=64, num_layers=2; the module's unsqueeze(1) gives T=1 but
    # the kernel is general, so use T=8 to exercise the recurrence. Small input size 16.
    B, T, I, H = 2, 8, 16, 64

    key = jax.random.PRNGKey(0)
    k_x, k_p = jax.random.split(key)
    x = jax.random.normal(k_x, (B, T, I), jnp.float32)
    params = init_params(k_p, I, H)

    out = hockey_lstm_classifier(x, params)
    out = jax.block_until_ready(out)

    ref = reference_forward(x, params)
    assert out.shape == (B, 1), out.shape
    # bf16 MXU operands vs. the f32 reference -> relaxed tolerance.
    assert jnp.allclose(out, ref, rtol=2e-2, atol=2e-2), (out, ref)

    print("KERNEL_OK")
</pallas_src>

<mosaic_0001>
module attributes {stable_mosaic.version = 11 : i64} {
  func.func @lstm_classifier_kernel(%arg0: memref<72x16xbf16, #tpu.memory_space<vmem>>, %arg1: memref<16x512xbf16, #tpu.memory_space<vmem>>, %arg2: memref<1x512xf32, #tpu.memory_space<vmem>>, %arg3: memref<128x512xbf16, #tpu.memory_space<vmem>>, %arg4: memref<1x128xf32, #tpu.memory_space<vmem>>, %arg5: memref<1x1xf32, #tpu.memory_space<vmem>>, %arg6: memref<8x1xf32, #tpu.memory_space<vmem>>, %arg7: memref<72x512xf32, #tpu.memory_space<vmem>>) attributes {dimension_semantics = [], scalar_prefetch = 0 : i64, scratch_operands = 1 : i64, tpu.core_type = #tpu.core_type<tc>} {
    %c0 = arith.constant 0 : index
    %c0_0 = arith.constant 0 : index
    %0 = vector.load %arg0[%c0, %c0_0] : memref<72x16xbf16, #tpu.memory_space<vmem>>, vector<72x16xbf16>
    %c0_1 = arith.constant 0 : index
    %c0_2 = arith.constant 0 : index
    %1 = vector.load %arg1[%c0_1, %c0_2] : memref<16x512xbf16, #tpu.memory_space<vmem>>, vector<16x512xbf16>
    %cst = arith.constant dense<0.000000e+00> : vector<72x512xf32>
    %2 = tpu.matmul %0, %1, %cst {dimension_numbers = #tpu.dot_dimension_numbers<[1], [0], [0], [1], [0, 0, 1, 1], [], []>} : vector<72x16xbf16>, vector<16x512xbf16>, vector<72x512xf32> -> vector<72x512xf32>
    %c0_3 = arith.constant 0 : index
    %c0_4 = arith.constant 0 : index
    %3 = vector.load %arg2[%c0_3, %c0_4] : memref<1x512xf32, #tpu.memory_space<vmem>>, vector<1x512xf32>
    %4 = vector.broadcast %3 : vector<1x512xf32> to vector<72x512xf32>
    %5 = arith.addf %2, %4 : vector<72x512xf32>
    %c0_5 = arith.constant 0 : index
    %c0_6 = arith.constant 0 : index
    %6 = vector.load %arg7[%c0_5, %c0_6] : memref<72x512xf32, #tpu.memory_space<vmem>>, vector<72x512xf32>
    tpu.vector_store %arg7[%c0_5, %c0_6], %5 {strides = array<i32>} : memref<72x512xf32, #tpu.memory_space<vmem>>, vector<72x512xf32>,
    %c0_7 = arith.constant 0 : index
    %c0_8 = arith.constant 0 : index
    %7 = vector.load %arg3[%c0_7, %c0_8] : memref<128x512xbf16, #tpu.memory_space<vmem>>, vector<128x512xbf16>
    %8 = tpu.iota {dimensions = array<i32: 1>} : vector<8x512xi32>
    %c256_i32 = arith.constant 256 : i32
    %9 = vector.broadcast %c256_i32 : i32 to vector<8x512xi32>
    %10 = arith.cmpi sge, %8, %9 : vector<8x512xi32>
    %c384_i32 = arith.constant 384 : i32
    %11 = vector.broadcast %c384_i32 : i32 to vector<8x512xi32>
    %12 = arith.cmpi slt, %8, %11 : vector<8x512xi32>
    %13 = arith.andi %10, %12 : vector<8x512xi1>
    %cst_9 = arith.constant 1.000000e+00 : f32
    %cst_10 = arith.constant 5.000000e-01 : f32
    %14 = vector.broadcast %cst_9 : f32 to vector<8x512xf32>
    %15 = vector.broadcast %cst_10 : f32 to vector<8x512xf32>
    %16 = arith.select %13, %14, %15 : vector<8x512xi1>, vector<8x512xf32>
    %cst_11 = arith.constant 0.000000e+00 : f32
    %cst_12 = arith.constant 5.000000e-01 : f32
    %17 = vector.broadcast %cst_11 : f32 to vector<8x512xf32>
    %18 = vector.broadcast %cst_12 : f32 to vector<8x512xf32>
    %19 = arith.select %13, %17, %18 : vector<8x512xi1>, vector<8x512xf32>
    %cst_13 = arith.constant 0.000000e+00 : f32
    %20 = vector.broadcast %cst_13 : f32 to vector<8x128xf32>
    %c0_14 = arith.constant 0 : index
    %c0_15 = arith.constant 0 : index
    %21 = vector.load %arg7[%c0_14, %c0_15] : memref<72x512xf32, #tpu.memory_space<vmem>>, vector<8x512xf32>
    %22 = arith.mulf %21, %16 : vector<8x512xf32>
    %23 = math.tanh %22 : vector<8x512xf32>
    %24 = arith.mulf %23, %16 : vector<8x512xf32>
    %25 = arith.addf %24, %19 : vector<8x512xf32>
    %26 = vector.extract_strided_slice %25 {offsets = [0, 0], sizes = [8, 128], strides = [1, 1]} : vector<8x512xf32> to vector<8x128xf32>
    %27 = vector.extract_strided_slice %25 {offsets = [0, 128], sizes = [8, 128], strides = [1, 1]} : vector<8x512xf32> to vector<8x128xf32>
    %28 = vector.extract_strided_slice %25 {offsets = [0, 256], sizes = [8, 128], strides = [1, 1]} : vector<8x512xf32> to vector<8x128xf32>
    %29 = vector.extract_strided_slice %25 {offsets = [0, 384], sizes = [8, 128], strides = [1, 1]} : vector<8x512xf32> to vector<8x128xf32>
    %30 = arith.mulf %27, %20 : vector<8x128xf32>
    %31 = arith.mulf %26, %28 : vector<8x128xf32>
    %32 = arith.addf %30, %31 : vector<8x128xf32>
    %33 = math.tanh %32 : vector<8x128xf32>
    %34 = arith.mulf %29, %33 : vector<8x128xf32>
    %35 = tpu.iota {dimensions = array<i32: 1>} : vector<8x128xi32>
    %c64_i32 = arith.constant 64 : i32
    %36 = vector.broadcast %c64_i32 : i32 to vector<8x128xi32>
    %37 = arith.cmpi sge, %35, %36 : vector<8x128xi32>
    %cst_16 = arith.constant 0.000000e+00 : f32
    %38 = vector.broadcast %cst_16 : f32 to vector<8x128xf32>
    %39 = arith.select %37, %34, %38 : vector<8x128xi1>, vector<8x128xf32>
    %cst_17 = arith.constant 0.000000e+00 : f32
    %40 = vector.broadcast %cst_17 : f32 to vector<8x128xf32>
    %41 = arith.select %37, %32, %40 : vector<8x128xi1>, vector<8x128xf32>
    %c0_i32 = arith.constant 0 : i32
    %c1_i32 = arith.constant 1 : i32
    %42 = arith.addi %c0_i32, %c1_i32 : i32
    %c8_i32 = arith.constant 8 : i32
    %43 = arith.muli %42, %c8_i32 : i32
    %44 = tpu.assume_multiple %43, 8 : i32
    %45 = arith.index_cast %44 : i32 to index
    %c0_18 = arith.constant 0 : index
    %46 = vector.load %arg7[%45, %c0_18] : memref<72x512xf32, #tpu.memory_space<vmem>>, vector<8x512xf32>
    %47 = arith.truncf %39 : vector<8x128xf32> to vector<8x128xbf16>
    %cst_19 = arith.constant dense<0.000000e+00> : vector<8x512xf32>
    %48 = tpu.matmul %47, %7, %cst_19 {dimension_numbers = #tpu.dot_dimension_numbers<[1], [0], [0], [1], [0, 0, 1, 1], [], []>} : vector<8x128xbf16>, vector<128x512xbf16>, vector<8x512xf32> -> vector<8x512xf32>
    %49 = arith.addf %48, %46 : vector<8x512xf32>
    %50 = arith.mulf %49, %16 : vector<8x512xf32>
    %51 = math.tanh %50 : vector<8x512xf32>
    %52 = arith.mulf %51, %16 : vector<8x512xf32>
    %53 = arith.addf %52, %19 : vector<8x512xf32>
    %54 = vector.extract_strided_slice %53 {offsets = [0, 0], sizes = [8, 128], strides = [1, 1]} : vector<8x512xf32> to vector<8x128xf32>
    %55 = vector.extract_strided_slice %53 {offsets = [0, 128], sizes = [8, 128], strides = [1, 1]} : vector<8x512xf32> to vector<8x128xf32>
    %56 = vector.extract_strided_slice %53 {offsets = [0, 256], sizes = [8, 128], strides = [1, 1]} : vector<8x512xf32> to vector<8x128xf32>
    %57 = vector.extract_strided_slice %53 {offsets = [0, 384], sizes = [8, 128], strides = [1, 1]} : vector<8x512xf32> to vector<8x128xf32>
    %58 = arith.mulf %55, %41 : vector<8x128xf32>
    %59 = arith.mulf %54, %56 : vector<8x128xf32>
    %60 = arith.addf %58, %59 : vector<8x128xf32>
    %61 = math.tanh %60 : vector<8x128xf32>
    %62 = arith.mulf %57, %61 : vector<8x128xf32>
    %c1_i32_20 = arith.constant 1 : i32
    %c1_i32_21 = arith.constant 1 : i32
    %63 = arith.addi %c1_i32_20, %c1_i32_21 : i32
    %c8_i32_22 = arith.constant 8 : i32
    %64 = arith.muli %63, %c8_i32_22 : i32
    %65 = tpu.assume_multiple %64, 8 : i32
    %66 = arith.index_cast %65 : i32 to index
    %c0_23 = arith.constant 0 : index
    %67 = vector.load %arg7[%66, %c0_23] : memref<72x512xf32, #tpu.memory_space<vmem>>, vector<8x512xf32>
    %68 = arith.truncf %62 : vector<8x128xf32> to vector<8x128xbf16>
    %cst_24 = arith.constant dense<0.000000e+00> : vector<8x512xf32>
    %69 = tpu.matmul %68, %7, %cst_24 {dimension_numbers = #tpu.dot_dimension_numbers<[1], [0], [0], [1], [0, 0, 1, 1], [], []>} : vector<8x128xbf16>, vector<128x512xbf16>, vector<8x512xf32> -> vector<8x512xf32>
    %70 = arith.addf %69, %67 : vector<8x512xf32>
    %71 = arith.mulf %70, %16 : vector<8x512xf32>
    %72 = math.tanh %71 : vector<8x512xf32>
    %73 = arith.mulf %72, %16 : vector<8x512xf32>
    %74 = arith.addf %73, %19 : vector<8x512xf32>
    %75 = vector.extract_strided_slice %74 {offsets = [0, 0], sizes = [8, 128], strides = [1, 1]} : vector<8x512xf32> to vector<8x128xf32>
    %76 = vector.extract_strided_slice %74 {offsets = [0, 128], sizes = [8, 128], strides = [1, 1]} : vector<8x512xf32> to vector<8x128xf32>
    %77 = vector.extract_strided_slice %74 {offsets = [0, 256], sizes = [8, 128], strides = [1, 1]} : vector<8x512xf32> to vector<8x128xf32>
    %78 = vector.extract_strided_slice %74 {offsets = [0, 384], sizes = [8, 128], strides = [1, 1]} : vector<8x512xf32> to vector<8x128xf32>
    %79 = arith.mulf %76, %60 : vector<8x128xf32>
    %80 = arith.mulf %75, %77 : vector<8x128xf32>
    %81 = arith.addf %79, %80 : vector<8x128xf32>
    %82 = math.tanh %81 : vector<8x128xf32>
    %83 = arith.mulf %78, %82 : vector<8x128xf32>
    %c2_i32 = arith.constant 2 : i32
    %c1_i32_25 = arith.constant 1 : i32
    %84 = arith.addi %c2_i32, %c1_i32_25 : i32
    %c8_i32_26 = arith.constant 8 : i32
    %85 = arith.muli %84, %c8_i32_26 : i32
    %86 = tpu.assume_multiple %85, 8 : i32
    %87 = arith.index_cast %86 : i32 to index
    %c0_27 = arith.constant 0 : index
    %88 = vector.load %arg7[%87, %c0_27] : memref<72x512xf32, #tpu.memory_space<vmem>>, vector<8x512xf32>
    %89 = arith.truncf %83 : vector<8x128xf32> to vector<8x128xbf16>
    %cst_28 = arith.constant dense<0.000000e+00> : vector<8x512xf32>
    %90 = tpu.matmul %89, %7, %cst_28 {dimension_numbers = #tpu.dot_dimension_numbers<[1], [0], [0], [1], [0, 0, 1, 1], [], []>} : vector<8x128xbf16>, vector<128x512xbf16>, vector<8x512xf32> -> vector<8x512xf32>
    %91 = arith.addf %90, %88 : vector<8x512xf32>
    %92 = arith.mulf %91, %16 : vector<8x512xf32>
    %93 = math.tanh %92 : vector<8x512xf32>
    %94 = arith.mulf %93, %16 : vector<8x512xf32>
    %95 = arith.addf %94, %19 : vector<8x512xf32>
    %96 = vector.extract_strided_slice %95 {offsets = [0, 0], sizes = [8, 128], strides = [1, 1]} : vector<8x512xf32> to vector<8x128xf32>
    %97 = vector.extract_strided_slice %95 {offsets = [0, 128], sizes = [8, 128], strides = [1, 1]} : vector<8x512xf32> to vector<8x128xf32>
    %98 = vector.extract_strided_slice %95 {offsets = [0, 256], sizes = [8, 128], strides = [1, 1]} : vector<8x512xf32> to vector<8x128xf32>
    %99 = vector.extract_strided_slice %95 {offsets = [0, 384], sizes = [8, 128], strides = [1, 1]} : vector<8x512xf32> to vector<8x128xf32>
    %100 = arith.mulf %97, %81 : vector<8x128xf32>
    %101 = arith.mulf %96, %98 : vector<8x128xf32>
    %102 = arith.addf %100, %101 : vector<8x128xf32>
    %103 = math.tanh %102 : vector<8x128xf32>
    %104 = arith.mulf %99, %103 : vector<8x128xf32>
    %c3_i32 = arith.constant 3 : i32
    %c1_i32_29 = arith.constant 1 : i32
    %105 = arith.addi %c3_i32, %c1_i32_29 : i32
    %c8_i32_30 = arith.constant 8 : i32
    %106 = arith.muli %105, %c8_i32_30 : i32
    %107 = tpu.assume_multiple %106, 8 : i32
    %108 = arith.index_cast %107 : i32 to index
    %c0_31 = arith.constant 0 : index
    %109 = vector.load %arg7[%108, %c0_31] : memref<72x512xf32, #tpu.memory_space<vmem>>, vector<8x512xf32>
    %110 = arith.truncf %104 : vector<8x128xf32> to vector<8x128xbf16>
    %cst_32 = arith.constant dense<0.000000e+00> : vector<8x512xf32>
    %111 = tpu.matmul %110, %7, %cst_32 {dimension_numbers = #tpu.dot_dimension_numbers<[1], [0], [0], [1], [0, 0, 1, 1], [], []>} : vector<8x128xbf16>, vector<128x512xbf16>, vector<8x512xf32> -> vector<8x512xf32>
    %112 = arith.addf %111, %109 : vector<8x512xf32>
    %113 = arith.mulf %112, %16 : vector<8x512xf32>
    %114 = math.tanh %113 : vector<8x512xf32>
    %115 = arith.mulf %114, %16 : vector<8x512xf32>
    %116 = arith.addf %115, %19 : vector<8x512xf32>
    %117 = vector.extract_strided_slice %116 {offsets = [0, 0], sizes = [8, 128], strides = [1, 1]} : vector<8x512xf32> to vector<8x128xf32>
    %118 = vector.extract_strided_slice %116 {offsets = [0, 128], sizes = [8, 128], strides = [1, 1]} : vector<8x512xf32> to vector<8x128xf32>
    %119 = vector.extract_strided_slice %116 {offsets = [0, 256], sizes = [8, 128], strides = [1, 1]} : vector<8x512xf32> to vector<8x128xf32>
    %120 = vector.extract_strided_slice %116 {offsets = [0, 384], sizes = [8, 128], strides = [1, 1]} : vector<8x512xf32> to vector<8x128xf32>
    %121 = arith.mulf %118, %102 : vector<8x128xf32>
    %122 = arith.mulf %117, %119 : vector<8x128xf32>
    %123 = arith.addf %121, %122 : vector<8x128xf32>
    %124 = math.tanh %123 : vector<8x128xf32>
    %125 = arith.mulf %120, %124 : vector<8x128xf32>
    %c4_i32 = arith.constant 4 : i32
    %c1_i32_33 = arith.constant 1 : i32
    %126 = arith.addi %c4_i32, %c1_i32_33 : i32
    %c8_i32_34 = arith.constant 8 : i32
    %127 = arith.muli %126, %c8_i32_34 : i32
    %128 = tpu.assume_multiple %127, 8 : i32
    %129 = arith.index_cast %128 : i32 to index
    %c0_35 = arith.constant 0 : index
    %130 = vector.load %arg7[%129, %c0_35] : memref<72x512xf32, #tpu.memory_space<vmem>>, vector<8x512xf32>
    %131 = arith.truncf %125 : vector<8x128xf32> to vector<8x128xbf16>
    %cst_36 = arith.constant dense<0.000000e+00> : vector<8x512xf32>
    %132 = tpu.matmul %131, %7, %cst_36 {dimension_numbers = #tpu.dot_dimension_numbers<[1], [0], [0], [1], [0, 0, 1, 1], [], []>} : vector<8x128xbf16>, vector<128x512xbf16>, vector<8x512xf32> -> vector<8x512xf32>
    %133 = arith.addf %132, %130 : vector<8x512xf32>
    %134 = arith.mulf %133, %16 : vector<8x512xf32>
    %135 = math.tanh %134 : vector<8x512xf32>
    %136 = arith.mulf %135, %16 : vector<8x512xf32>
    %137 = arith.addf %136, %19 : vector<8x512xf32>
    %138 = vector.extract_strided_slice %137 {offsets = [0, 0], sizes = [8, 128], strides = [1, 1]} : vector<8x512xf32> to vector<8x128xf32>
    %139 = vector.extract_strided_slice %137 {offsets = [0, 128], sizes = [8, 128], strides = [1, 1]} : vector<8x512xf32> to vector<8x128xf32>
    %140 = vector.extract_strided_slice %137 {offsets = [0, 256], sizes = [8, 128], strides = [1, 1]} : vector<8x512xf32> to vector<8x128xf32>
    %141 = vector.extract_strided_slice %137 {offsets = [0, 384], sizes = [8, 128], strides = [1, 1]} : vector<8x512xf32> to vector<8x128xf32>
    %142 = arith.mulf %139, %123 : vector<8x128xf32>
    %143 = arith.mulf %138, %140 : vector<8x128xf32>
    %144 = arith.addf %142, %143 : vector<8x128xf32>
    %145 = math.tanh %144 : vector<8x128xf32>
    %146 = arith.mulf %141, %145 : vector<8x128xf32>
    %c5_i32 = arith.constant 5 : i32
    %c1_i32_37 = arith.constant 1 : i32
    %147 = arith.addi %c5_i32, %c1_i32_37 : i32
    %c8_i32_38 = arith.constant 8 : i32
    %148 = arith.muli %147, %c8_i32_38 : i32
    %149 = tpu.assume_multiple %148, 8 : i32
    %150 = arith.index_cast %149 : i32 to index
    %c0_39 = arith.constant 0 : index
    %151 = vector.load %arg7[%150, %c0_39] : memref<72x512xf32, #tpu.memory_space<vmem>>, vector<8x512xf32>
    %152 = arith.truncf %146 : vector<8x128xf32> to vector<8x128xbf16>
    %cst_40 = arith.constant dense<0.000000e+00> : vector<8x512xf32>
    %153 = tpu.matmul %152, %7, %cst_40 {dimension_numbers = #tpu.dot_dimension_numbers<[1], [0], [0], [1], [0, 0, 1, 1], [], []>} : vector<8x128xbf16>, vector<128x512xbf16>, vector<8x512xf32> -> vector<8x512xf32>
    %154 = arith.addf %153, %151 : vector<8x512xf32>
    %155 = arith.mulf %154, %16 : vector<8x512xf32>
    %156 = math.tanh %155 : vector<8x512xf32>
    %157 = arith.mulf %156, %16 : vector<8x512xf32>
    %158 = arith.addf %157, %19 : vector<8x512xf32>
    %159 = vector.extract_strided_slice %158 {offsets = [0, 0], sizes = [8, 128], strides = [1, 1]} : vector<8x512xf32> to vector<8x128xf32>
    %160 = vector.extract_strided_slice %158 {offsets = [0, 128], sizes = [8, 128], strides = [1, 1]} : vector<8x512xf32> to vector<8x128xf32>
    %161 = vector.extract_strided_slice %158 {offsets = [0, 256], sizes = [8, 128], strides = [1, 1]} : vector<8x512xf32> to vector<8x128xf32>
    %162 = vector.extract_strided_slice %158 {offsets = [0, 384], sizes = [8, 128], strides = [1, 1]} : vector<8x512xf32> to vector<8x128xf32>
    %163 = arith.mulf %160, %144 : vector<8x128xf32>
    %164 = arith.mulf %159, %161 : vector<8x128xf32>
    %165 = arith.addf %163, %164 : vector<8x128xf32>
    %166 = math.tanh %165 : vector<8x128xf32>
    %167 = arith.mulf %162, %166 : vector<8x128xf32>
    %c6_i32 = arith.constant 6 : i32
    %c1_i32_41 = arith.constant 1 : i32
    %168 = arith.addi %c6_i32, %c1_i32_41 : i32
    %c8_i32_42 = arith.constant 8 : i32
    %169 = arith.muli %168, %c8_i32_42 : i32
    %170 = tpu.assume_multiple %169, 8 : i32
    %171 = arith.index_cast %170 : i32 to index
    %c0_43 = arith.constant 0 : index
    %172 = vector.load %arg7[%171, %c0_43] : memref<72x512xf32, #tpu.memory_space<vmem>>, vector<8x512xf32>
    %173 = arith.truncf %167 : vector<8x128xf32> to vector<8x128xbf16>
    %cst_44 = arith.constant dense<0.000000e+00> : vector<8x512xf32>
    %174 = tpu.matmul %173, %7, %cst_44 {dimension_numbers = #tpu.dot_dimension_numbers<[1], [0], [0], [1], [0, 0, 1, 1], [], []>} : vector<8x128xbf16>, vector<128x512xbf16>, vector<8x512xf32> -> vector<8x512xf32>
    %175 = arith.addf %174, %172 : vector<8x512xf32>
    %176 = arith.mulf %175, %16 : vector<8x512xf32>
    %177 = math.tanh %176 : vector<8x512xf32>
    %178 = arith.mulf %177, %16 : vector<8x512xf32>
    %179 = arith.addf %178, %19 : vector<8x512xf32>
    %180 = vector.extract_strided_slice %179 {offsets = [0, 0], sizes = [8, 128], strides = [1, 1]} : vector<8x512xf32> to vector<8x128xf32>
    %181 = vector.extract_strided_slice %179 {offsets = [0, 128], sizes = [8, 128], strides = [1, 1]} : vector<8x512xf32> to vector<8x128xf32>
    %182 = vector.extract_strided_slice %179 {offsets = [0, 256], sizes = [8, 128], strides = [1, 1]} : vector<8x512xf32> to vector<8x128xf32>
    %183 = vector.extract_strided_slice %179 {offsets = [0, 384], sizes = [8, 128], strides = [1, 1]} : vector<8x512xf32> to vector<8x128xf32>
    %184 = arith.mulf %181, %165 : vector<8x128xf32>
    %185 = arith.mulf %180, %182 : vector<8x128xf32>
    %186 = arith.addf %184, %185 : vector<8x128xf32>
    %187 = math.tanh %186 : vector<8x128xf32>
    %188 = arith.mulf %183, %187 : vector<8x128xf32>
    %c7_i32 = arith.constant 7 : i32
    %c1_i32_45 = arith.constant 1 : i32
    %189 = arith.addi %c7_i32, %c1_i32_45 : i32
    %c8_i32_46 = arith.constant 8 : i32
    %190 = arith.muli %189, %c8_i32_46 : i32
    %191 = tpu.assume_multiple %190, 8 : i32
    %192 = arith.index_cast %191 : i32 to index
    %c0_47 = arith.constant 0 : index
    %193 = vector.load %arg7[%192, %c0_47] : memref<72x512xf32, #tpu.memory_space<vmem>>, vector<8x512xf32>
    %194 = arith.truncf %188 : vector<8x128xf32> to vector<8x128xbf16>
    %cst_48 = arith.constant dense<0.000000e+00> : vector<8x512xf32>
    %195 = tpu.matmul %194, %7, %cst_48 {dimension_numbers = #tpu.dot_dimension_numbers<[1], [0], [0], [1], [0, 0, 1, 1], [], []>} : vector<8x128xbf16>, vector<128x512xbf16>, vector<8x512xf32> -> vector<8x512xf32>
    %196 = arith.addf %195, %193 : vector<8x512xf32>
    %197 = arith.mulf %196, %16 : vector<8x512xf32>
    %198 = math.tanh %197 : vector<8x512xf32>
    %199 = arith.mulf %198, %16 : vector<8x512xf32>
    %200 = arith.addf %199, %19 : vector<8x512xf32>
    %201 = vector.extract_strided_slice %200 {offsets = [0, 0], sizes = [8, 128], strides = [1, 1]} : vector<8x512xf32> to vector<8x128xf32>
    %202 = vector.extract_strided_slice %200 {offsets = [0, 128], sizes = [8, 128], strides = [1, 1]} : vector<8x512xf32> to vector<8x128xf32>
    %203 = vector.extract_strided_slice %200 {offsets = [0, 256], sizes = [8, 128], strides = [1, 1]} : vector<8x512xf32> to vector<8x128xf32>
    %204 = vector.extract_strided_slice %200 {offsets = [0, 384], sizes = [8, 128], strides = [1, 1]} : vector<8x512xf32> to vector<8x128xf32>
    %205 = arith.mulf %202, %186 : vector<8x128xf32>
    %206 = arith.mulf %201, %203 : vector<8x128xf32>
    %207 = arith.addf %205, %206 : vector<8x128xf32>
    %208 = math.tanh %207 : vector<8x128xf32>
    %209 = arith.mulf %204, %208 : vector<8x128xf32>
    %c8_i32_49 = arith.constant 8 : i32
    %c0_50 = arith.constant 0 : index
    %c0_51 = arith.constant 0 : index
    %210 = vector.load %arg4[%c0_50, %c0_51] : memref<1x128xf32, #tpu.memory_space<vmem>>, vector<1x128xf32>
    %211 = vector.broadcast %210 : vector<1x128xf32> to vector<8x128xf32>
    %212 = arith.mulf %209, %211 : vector<8x128xf32>
    %cst_52 = arith.constant dense<0.000000e+00> : vector<8xf32>
    %213 = vector.multi_reduction <add>, %212, %cst_52 [1] : vector<8x128xf32> to vector<8xf32>
    %214 = vector.shape_cast %213 : vector<8xf32> to vector<8x1xf32>
    %c0_53 = arith.constant 0 : index
    %c0_54 = arith.constant 0 : index
    %215 = vector.load %arg5[%c0_53, %c0_54] : memref<1x1xf32, #tpu.memory_space<vmem>>, vector<1x1xf32>
    %216 = vector.broadcast %215 : vector<1x1xf32> to vector<8x1xf32>
    %217 = arith.addf %214, %216 : vector<8x1xf32>
    %cst_55 = arith.constant 5.000000e-01 : f32
    %218 = vector.broadcast %cst_55 : f32 to vector<8x1xf32>
    %219 = arith.mulf %218, %217 : vector<8x1xf32>
    %220 = math.tanh %219 : vector<8x1xf32>
    %cst_56 = arith.constant 5.000000e-01 : f32
    %221 = vector.broadcast %cst_56 : f32 to vector<8x1xf32>
    %222 = arith.mulf %221, %220 : vector<8x1xf32>
    %cst_57 = arith.constant 5.000000e-01 : f32
    %223 = vector.broadcast %cst_57 : f32 to vector<8x1xf32>
    %224 = arith.addf %222, %223 : vector<8x1xf32>
    %c0_58 = arith.constant 0 : index
    %c0_59 = arith.constant 0 : index
    %225 = vector.load %arg6[%c0_58, %c0_59] : memref<8x1xf32, #tpu.memory_space<vmem>>, vector<8x1xf32>
    tpu.vector_store %arg6[%c0_58, %c0_59], %224 {strides = array<i32>} : memref<8x1xf32, #tpu.memory_space<vmem>>, vector<8x1xf32>,
    return
  }
}

</mosaic_0001>

<llo_original>
// kernel: tpu_custom_call.1
$region0: #{tpu_custom_call.1}
  #allocation0 [shape = 'u32[]', space=smem, size = 0x4, offset = 0x4, fixed_abs, tag = 'smem constant byte address 0x4 - core index']
  #allocation1 [shape = 'u32[144,128]{1,0:T(1,128)}', space=vmem, size = 0x12000, scoped, tag = 'internal scratch']
  #allocation2 [shape = 'f32[72,512]{1,0:T(8,128)}', space=vmem, size = 0x24000, scoped, tag = 'scratch operand']
  #allocation3 [shape = 'f32[1,1]{1,0:T(1,128)S(1)}', space=vmem, size = 0x200, scoped, tag = 'scoped memory for tpu_custom_call.1']
  %s0 = inlined_call_operand.vmem [shape: bf16[72,16], index: 0, kind: input, shape index: {}]
  %s1 = inlined_call_operand.vmem [shape: bf16[16,512], index: 1, kind: input, shape index: {}]
  %s2 = inlined_call_operand.vmem [shape: f32[1,512], index: 2, kind: input, shape index: {}]
  %s3 = inlined_call_operand.hbm [shape: bf16[128,512], index: 3, kind: input, shape index: {}]
  %s4 = inlined_call_operand.vmem [shape: f32[1,128], index: 4, kind: input, shape index: {}]
  %s5 = inlined_call_operand.<no memory space> [shape: f32[1,1], index: 5, kind: input, shape index: {}]
  %s6 = inlined_call_operand.vmem [shape: f32[8,1], index: 6, kind: output, shape index: {}]
  %s7 = sld [smem:[#allocation0]]
  $region38: #{tpu_custom_call.1} parent=0
    _
  %s9 = ssub.s32 1, %s7
  %s10 = scalar_select 0, %s9, %s7
  %v11 = vstv %s5
  %12 = vst [vmem:[#allocation3] sm:$0x1] %v11
  $region1: #{tpu_custom_call.1} parent=0
    #allocation4 [shape = 'u8[131072]{0}', space=vmem, size = 0x20000, scoped, tag = 'input window, operand 3, single buffered']
    #allocation5 [shape = 's32[1]{0}', space=sflag, size = 0x4, scoped, tag = 'scoped memory for tpu_custom_call.1']
    %13 = vsyncpa [#allocation5], 0
    // Predicated region
    $region2: #{tpu_custom_call.1} parent=1 // pred_check
      _
    $region3: #{tpu_custom_call.1} parent=1 // pred_check_branch
      %15 = sbr.rel (0) target = $region5
    $region4: #{tpu_custom_call.1} parent=1 // pred_region
      _
    $region5: #{tpu_custom_call.1} parent=1 // pred_fallthru
      _
    // Predicated region
    $region6: #{tpu_custom_call.1} parent=1 // pred_check
      _
    $region7: #{tpu_custom_call.1} parent=1 // pred_check_branch
      %17 = sbr.rel (0) target = $region9
    $region8: #{tpu_custom_call.1} parent=1 // pred_region
      _
    $region9: #{tpu_custom_call.1} parent=1 // pred_fallthru
      _
    // Predicated region
    $region10: #{tpu_custom_call.1} parent=1 // pred_check
      _
    $region11: #{tpu_custom_call.1} parent=1 // pred_check_branch
      %19 = sbr.rel (0) target = $region13
    $region12: #{tpu_custom_call.1} parent=1 // pred_region
      _
    $region13: #{tpu_custom_call.1} parent=1 // pred_fallthru
      _
    // Predicated region
    $region14: #{tpu_custom_call.1} parent=1 // pred_check
      _
    $region15: #{tpu_custom_call.1} parent=1 // pred_check_branch
      %21 = sbr.rel (0) target = $region17
    $region16: #{tpu_custom_call.1} parent=1 // pred_region
      %s23 = ssub.s32 4096, 4096
      %24 = vsyncadd [#allocation5], %s23
      %s25 = sshll.u32 [#allocation4], 4
      %s26 = int_to_ptr.vmem [resolvable:$true] %s25
      %31 = dma.hbm_to_vmem [thread:$0]  %s3, 4096, %s26, [#allocation5], 256, 256, 16
    $region17: #{tpu_custom_call.1} parent=1 // pred_fallthru
      _
    // Predicated region
    $region18: #{tpu_custom_call.1} parent=1 // pred_check
      _
    $region19: #{tpu_custom_call.1} parent=1 // pred_check_branch
      %33 = sbr.rel (0) target = $region21
    $region20: #{tpu_custom_call.1} parent=1 // pred_region
      _
    $region21: #{tpu_custom_call.1} parent=1 // pred_fallthru
      _
    // Predicated region
    $region22: #{tpu_custom_call.1} parent=1 // pred_check
      _
    $region23: #{tpu_custom_call.1} parent=1 // pred_check_branch
      %35 = sbr.rel (0) target = $region25
    $region24: #{tpu_custom_call.1} parent=1 // pred_region
      _
    $region25: #{tpu_custom_call.1} parent=1 // pred_fallthru
      _
    // Predicated region
    $region26: #{tpu_custom_call.1} parent=1 // pred_check
      _
    $region27: #{tpu_custom_call.1} parent=1 // pred_check_branch
      %37 = sbr.rel (0) target = $region29
    $region28: #{tpu_custom_call.1} parent=1 // pred_region
      %38 = dma.done [#allocation5], 4096
    $region29: #{tpu_custom_call.1} parent=1 // pred_fallthru
      _
    %v40 = vld [vmem:[%s0] sm:$0xf]
    %v41 = vld [vmem:[%s0 + $0x4] sm:$0xf]
    %v42 = vld [vmem:[%s0 + $0x8] sm:$0xf]
    %v43 = vld [vmem:[%s0 + $0xc] sm:$0xf]
    %v44 = vld [vmem:[%s0 + $0x10] sm:$0xf]
    %v45 = vld [vmem:[%s0 + $0x14] sm:$0xf]
    %v46 = vld [vmem:[%s0 + $0x18] sm:$0xf]
    %v47 = vld [vmem:[%s0 + $0x1c] sm:$0xf]
    %v48 = vld [vmem:[%s0 + $0x20] sm:$0xf]
    %v49 = vld [vmem:[%s1] sm:$0xff]
    %v50 = vld [vmem:[%s1 + $0x8] sm:$0xff]
    %v51 = vld [vmem:[%s1 + $0x10] sm:$0xff]
    %v52 = vld [vmem:[%s1 + $0x18] sm:$0xff]
    %v53 = vld [vmem:[%s2] sm:$0xf]
    %v55 = vlaneseq
    %v56 = vshrl.u32 %v55, 7
    %v57 = vsub.s32 0, %v56
    %v58 = vrot.slane %v53, %v57
    %v59 = vlaneseq
    %v60 = vshrl.u32 %v59, 7
    %v61 = vsub.s32 1, %v60
    %v62 = vrot.slane %v53, %v61
    %v63 = vlaneseq
    %v64 = vshrl.u32 %v63, 7
    %v65 = vsub.s32 2, %v64
    %v66 = vrot.slane %v53, %v65
    %v67 = vlaneseq
    %v68 = vshrl.u32 %v67, 7
    %v69 = vsub.s32 3, %v68
    %v70 = vrot.slane %v53, %v69
    %v84 = vunpack.c.l.b16 %v40
    %v85 = vunpack.c.l.b16 %v41
    %v86 = vunpack.c.l.b16 %v42
    %v87 = vunpack.c.l.b16 %v43
    %v88 = vunpack.c.l.b16 %v44
    %v89 = vunpack.c.l.b16 %v45
    %v90 = vunpack.c.l.b16 %v46
    %v91 = vunpack.c.l.b16 %v47
    %v92 = vunpack.c.l.b16 %v48
    %v93 = vpack.c.b16 %v85, %v84
    %v94 = vpack.c.b16 %v87, %v86
    %v95 = vpack.c.b16 %v89, %v88
    %v96 = vpack.c.b16 %v91, %v90
    %v97 = vpack.c.b16 %v92, %v92
    %v102 = vunpack.c.l.b16 %v49
    %v103 = vunpack.c.h.b16 %v49
    %v104 = vunpack.c.l.b16 %v50
    %v105 = vunpack.c.h.b16 %v50
    %v106 = vunpack.c.l.b16 %v51
    %v107 = vunpack.c.h.b16 %v51
    %v108 = vunpack.c.l.b16 %v52
    %v109 = vunpack.c.h.b16 %v52
    %v110 = vpack.c.b16 %v106, %v102
    %v111 = vpack.c.b16 %v107, %v103
    %v112 = vpack.c.b16 %v108, %v104
    %v113 = vpack.c.b16 %v109, %v105
    %vm118 = vcmask 130048
    %v120 = vsel %vm118, %v93, 0
    %v123 = vsel %vm118, %v94, 0
    %v126 = vsel %vm118, %v95, 0
    %v129 = vsel %vm118, %v96, 0
    %v132 = vsel %vm118, %v97, 0
    %134 = vmatprep.subr.bf16.mxu0 0
    %135 = vmatpush1.bf16.msra.mxu0 0
    %136 = vmatprep.subr.bf16.mxu0 0
    %137 = vmatpush1.bf16.msra.mxu0 0
    %138 = vmatprep.subr.bf16.mxu0 0
    %139 = vmatpush1.bf16.msra.mxu0 0
    %140 = vmatprep.subr.bf16.mxu0 0
    %141 = vmatpush1.bf16.msra.mxu0 0
    %142 = vmatprep.subr.bf16.mxu0 0
    %143 = vmatpush1.bf16.msra.mxu0 0
    %144 = vmatprep.subr.bf16.mxu0 0
    %145 = vmatpush1.bf16.msra.mxu0 0
    %146 = vmatprep.subr.bf16.mxu0 0
    %147 = vmatpush1.bf16.msra.mxu0 0
    %148 = vmatprep.subr.bf16.mxu0 %v111
    %149 = vmatpush1.bf16.msra.mxu0 %v110
    %150 = vmatprep.subr.bf16.mxu0 0
    %151 = vmatpush2.bf16.msra.mxu0 0
    %152 = vmatprep.subr.bf16.mxu0 0
    %153 = vmatpush2.bf16.msra.mxu0 0
    %154 = vmatprep.subr.bf16.mxu0 0
    %155 = vmatpush2.bf16.msra.mxu0 0
    %156 = vmatprep.subr.bf16.mxu0 0
    %157 = vmatpush2.bf16.msra.mxu0 0
    %158 = vmatprep.subr.bf16.mxu0 0
    %159 = vmatpush2.bf16.msra.mxu0 0
    %160 = vmatprep.subr.bf16.mxu0 0
    %161 = vmatpush2.bf16.msra.mxu0 0
    %162 = vmatprep.subr.bf16.mxu0 0
    %163 = vmatpush2.bf16.msra.mxu0 0
    %164 = vmatprep.subr.bf16.mxu0 0
    %165 = vmatpush2.bf16.msra.mxu0 0
    %166 = vmatprep.mubr.bf16.mxu0 0
    %167 = vmatmul.mubr.bf16.gmra.mxu0 %v120
    %v168 = vpop.f32.mrf.mxu0
    %v169 = vadd.f32 %v58, %v168
    %v170 = vpop.f32.mrf.mxu0
    %v171 = vadd.f32 %v62, %v170
    %v172 = vpop.f32.mrf.mxu0
    %v173 = vadd.f32 %v58, %v172
    %v174 = vpop.f32.mrf.mxu0
    %v175 = vadd.f32 %v62, %v174
    %176 = vmatprep.mubr.bf16.mxu0 0
    %177 = vmatmul.mubr.bf16.gmra.mxu0 %v123
    %v178 = vpop.f32.mrf.mxu0
    %v179 = vadd.f32 %v58, %v178
    %v180 = vpop.f32.mrf.mxu0
    %v181 = vadd.f32 %v62, %v180
    %v182 = vpop.f32.mrf.mxu0
    %v183 = vadd.f32 %v58, %v182
    %v184 = vpop.f32.mrf.mxu0
    %v185 = vadd.f32 %v62, %v184
    %186 = vmatprep.mubr.bf16.mxu0 0
    %187 = vmatmul.mubr.bf16.gmra.mxu0 %v126
    %v188 = vpop.f32.mrf.mxu0
    %v189 = vadd.f32 %v58, %v188
    %v190 = vpop.f32.mrf.mxu0
    %v191 = vadd.f32 %v62, %v190
    %v192 = vpop.f32.mrf.mxu0
    %v193 = vadd.f32 %v58, %v192
    %v194 = vpop.f32.mrf.mxu0
    %v195 = vadd.f32 %v62, %v194
    %196 = vmatprep.mubr.bf16.mxu0 0
    %197 = vmatmul.mubr.bf16.gmra.mxu0 %v129
    %v198 = vpop.f32.mrf.mxu0
    %v199 = vadd.f32 %v58, %v198
    %v200 = vpop.f32.mrf.mxu0
    %v201 = vadd.f32 %v62, %v200
    %v202 = vpop.f32.mrf.mxu0
    %v203 = vadd.f32 %v58, %v202
    %v204 = vpop.f32.mrf.mxu0
    %v205 = vadd.f32 %v62, %v204
    %206 = vmatprep.mubr.bf16.mxu0 0
    %207 = vmatmul.mubr.bf16.gmra.mxu0 %v132
    %v208 = vpop.f32.mrf.mxu0
    %v209 = vadd.f32 %v58, %v208
    %v210 = vpop.f32.mrf.mxu0
    %v211 = vadd.f32 %v62, %v210
    %v212 = vpop.f32.mrf.mxu0
    %v213 = vpop.f32.mrf.mxu0
    %214 = vdwg.mxu0
    %215 = vmatprep.subr.bf16.mxu0 0
    %216 = vmatpush1.bf16.msra.mxu0 0
    %217 = vmatprep.subr.bf16.mxu0 0
    %218 = vmatpush1.bf16.msra.mxu0 0
    %219 = vmatprep.subr.bf16.mxu0 0
    %220 = vmatpush1.bf16.msra.mxu0 0
    %221 = vmatprep.subr.bf16.mxu0 0
    %222 = vmatpush1.bf16.msra.mxu0 0
    %223 = vmatprep.subr.bf16.mxu0 0
    %224 = vmatpush1.bf16.msra.mxu0 0
    %225 = vmatprep.subr.bf16.mxu0 0
    %226 = vmatpush1.bf16.msra.mxu0 0
    %227 = vmatprep.subr.bf16.mxu0 0
    %228 = vmatpush1.bf16.msra.mxu0 0
    %229 = vmatprep.subr.bf16.mxu0 %v113
    %230 = vmatpush1.bf16.msra.mxu0 %v112
    %231 = vmatprep.subr.bf16.mxu0 0
    %232 = vmatpush2.bf16.msra.mxu0 0
    %233 = vmatprep.subr.bf16.mxu0 0
    %234 = vmatpush2.bf16.msra.mxu0 0
    %235 = vmatprep.subr.bf16.mxu0 0
    %236 = vmatpush2.bf16.msra.mxu0 0
    %237 = vmatprep.subr.bf16.mxu0 0
    %238 = vmatpush2.bf16.msra.mxu0 0
    %239 = vmatprep.subr.bf16.mxu0 0
    %240 = vmatpush2.bf16.msra.mxu0 0
    %241 = vmatprep.subr.bf16.mxu0 0
    %242 = vmatpush2.bf16.msra.mxu0 0
    %243 = vmatprep.subr.bf16.mxu0 0
    %244 = vmatpush2.bf16.msra.mxu0 0
    %245 = vmatprep.subr.bf16.mxu0 0
    %246 = vmatpush2.bf16.msra.mxu0 0
    %247 = vmatprep.mubr.bf16.mxu0 0
    %248 = vmatmul.mubr.bf16.gmra.mxu0 %v120
    %v249 = vpop.f32.mrf.mxu0
    %v250 = vadd.f32 %v66, %v249
    %v251 = vpop.f32.mrf.mxu0
    %v252 = vadd.f32 %v70, %v251
    %v253 = vpop.f32.mrf.mxu0
    %v254 = vadd.f32 %v66, %v253
    %v255 = vpop.f32.mrf.mxu0
    %v256 = vadd.f32 %v70, %v255
    %257 = vmatprep.mubr.bf16.mxu0 0
    %258 = vmatmul.mubr.bf16.gmra.mxu0 %v123
    %v259 = vpop.f32.mrf.mxu0
    %v260 = vadd.f32 %v66, %v259
    %v261 = vpop.f32.mrf.mxu0
    %v262 = vadd.f32 %v70, %v261
    %v263 = vpop.f32.mrf.mxu0
    %v264 = vadd.f32 %v66, %v263
    %v265 = vpop.f32.mrf.mxu0
    %v266 = vadd.f32 %v70, %v265
    %267 = vmatprep.mubr.bf16.mxu0 0
    %268 = vmatmul.mubr.bf16.gmra.mxu0 %v126
    %v269 = vpop.f32.mrf.mxu0
    %v270 = vadd.f32 %v66, %v269
    %v271 = vpop.f32.mrf.mxu0
    %v272 = vadd.f32 %v70, %v271
    %v273 = vpop.f32.mrf.mxu0
    %v274 = vadd.f32 %v66, %v273
    %v275 = vpop.f32.mrf.mxu0
    %v276 = vadd.f32 %v70, %v275
    %277 = vmatprep.mubr.bf16.mxu0 0
    %278 = vmatmul.mubr.bf16.gmra.mxu0 %v129
    %v279 = vpop.f32.mrf.mxu0
    %v280 = vadd.f32 %v66, %v279
    %v281 = vpop.f32.mrf.mxu0
    %v282 = vadd.f32 %v70, %v281
    %v283 = vpop.f32.mrf.mxu0
    %v284 = vadd.f32 %v66, %v283
    %v285 = vpop.f32.mrf.mxu0
    %v286 = vadd.f32 %v70, %v285
    %287 = vmatprep.mubr.bf16.mxu0 0
    %288 = vmatmul.mubr.bf16.gmra.mxu0 %v132
    %v289 = vpop.f32.mrf.mxu0
    %v290 = vadd.f32 %v66, %v289
    %v291 = vpop.f32.mrf.mxu0
    %v292 = vadd.f32 %v70, %v291
    %v293 = vpop.f32.mrf.mxu0
    %v294 = vpop.f32.mrf.mxu0
    %295 = vdwg.mxu0
    %296 = vst [vmem:[#allocation2] sm:$0xff] %v169
    %297 = vst [vmem:[#allocation2 + $0x8] sm:$0xff] %v171
    %298 = vst [vmem:[#allocation2 + $0x10] sm:$0xff] %v250
    %299 = vst [vmem:[#allocation2 + $0x18] sm:$0xff] %v252
    %300 = vst [vmem:[#allocation2 + $0x20] sm:$0xff] %v173
    %301 = vst [vmem:[#allocation2 + $0x28] sm:$0xff] %v175
    %302 = vst [vmem:[#allocation2 + $0x30] sm:$0xff] %v254
    %303 = vst [vmem:[#allocation2 + $0x38] sm:$0xff] %v256
    %304 = vst [vmem:[#allocation2 + $0x40] sm:$0xff] %v179
    %305 = vst [vmem:[#allocation2 + $0x48] sm:$0xff] %v181
    %306 = vst [vmem:[#allocation2 + $0x50] sm:$0xff] %v260
    %307 = vst [vmem:[#allocation2 + $0x58] sm:$0xff] %v262
    %308 = vst [vmem:[#allocation2 + $0x60] sm:$0xff] %v183
    %309 = vst [vmem:[#allocation2 + $0x68] sm:$0xff] %v185
    %310 = vst [vmem:[#allocation2 + $0x70] sm:$0xff] %v264
    %311 = vst [vmem:[#allocation2 + $0x78] sm:$0xff] %v266
    %312 = vst [vmem:[#allocation2 + $0x80] sm:$0xff] %v189
    %313 = vst [vmem:[#allocation2 + $0x88] sm:$0xff] %v191
    %314 = vst [vmem:[#allocation2 + $0x90] sm:$0xff] %v270
    %315 = vst [vmem:[#allocation2 + $0x98] sm:$0xff] %v272
    %316 = vst [vmem:[#allocation2 + $0xa0] sm:$0xff] %v193
    %317 = vst [vmem:[#allocation2 + $0xa8] sm:$0xff] %v195
    %318 = vst [vmem:[#allocation2 + $0xb0] sm:$0xff] %v274
    %319 = vst [vmem:[#allocation2 + $0xb8] sm:$0xff] %v276
    %320 = vst [vmem:[#allocation2 + $0xc0] sm:$0xff] %v199
    %321 = vst [vmem:[#allocation2 + $0xc8] sm:$0xff] %v201
    %322 = vst [vmem:[#allocation2 + $0xd0] sm:$0xff] %v280
    %323 = vst [vmem:[#allocation2 + $0xd8] sm:$0xff] %v282
    %324 = vst [vmem:[#allocation2 + $0xe0] sm:$0xff] %v203
    %325 = vst [vmem:[#allocation2 + $0xe8] sm:$0xff] %v205
    %326 = vst [vmem:[#allocation2 + $0xf0] sm:$0xff] %v284
    %327 = vst [vmem:[#allocation2 + $0xf8] sm:$0xff] %v286
    %328 = vst [vmem:[#allocation2 + $0x100] sm:$0xff] %v209
    %329 = vst [vmem:[#allocation2 + $0x108] sm:$0xff] %v211
    %330 = vst [vmem:[#allocation2 + $0x110] sm:$0xff] %v290
    %331 = vst [vmem:[#allocation2 + $0x118] sm:$0xff] %v292
    %v332 = vld [vmem:[#allocation4] sm:$0xff]
    %v333 = vld [vmem:[#allocation4 + $0x8] sm:$0xff]
    %v334 = vld [vmem:[#allocation4 + $0x10] sm:$0xff]
    %v335 = vld [vmem:[#allocation4 + $0x18] sm:$0xff]
    %v336 = vld [vmem:[#allocation4 + $0x20] sm:$0xff]
    %v337 = vld [vmem:[#allocation4 + $0x28] sm:$0xff]
    %v338 = vld [vmem:[#allocation4 + $0x30] sm:$0xff]
    %v339 = vld [vmem:[#allocation4 + $0x38] sm:$0xff]
    %v340 = vld [vmem:[#allocation4 + $0x40] sm:$0xff]
    %v341 = vld [vmem:[#allocation4 + $0x48] sm:$0xff]
    %v342 = vld [vmem:[#allocation4 + $0x50] sm:$0xff]
    %v343 = vld [vmem:[#allocation4 + $0x58] sm:$0xff]
    %v344 = vld [vmem:[#allocation4 + $0x60] sm:$0xff]
    %v345 = vld [vmem:[#allocation4 + $0x68] sm:$0xff]
    %v346 = vld [vmem:[#allocation4 + $0x70] sm:$0xff]
    %v347 = vld [vmem:[#allocation4 + $0x78] sm:$0xff]
    %v348 = vld [vmem:[#allocation4 + $0x80] sm:$0xff]
    %v349 = vld [vmem:[#allocation4 + $0x88] sm:$0xff]
    %v350 = vld [vmem:[#allocation4 + $0x90] sm:$0xff]
    %v351 = vld [vmem:[#allocation4 + $0x98] sm:$0xff]
    %v352 = vld [vmem:[#allocation4 + $0xa0] sm:$0xff]
    %v353 = vld [vmem:[#allocation4 + $0xa8] sm:$0xff]
    %v354 = vld [vmem:[#allocation4 + $0xb0] sm:$0xff]
    %v355 = vld [vmem:[#allocation4 + $0xb8] sm:$0xff]
    %v356 = vld [vmem:[#allocation4 + $0xc0] sm:$0xff]
    %v357 = vld [vmem:[#allocation4 + $0xc8] sm:$0xff]
    %v358 = vld [vmem:[#allocation4 + $0xd0] sm:$0xff]
    %v359 = vld [vmem:[#allocation4 + $0xd8] sm:$0xff]
    %v360 = vld [vmem:[#allocation4 + $0xe0] sm:$0xff]
    %v361 = vld [vmem:[#allocation4 + $0xe8] sm:$0xff]
    %v362 = vld [vmem:[#allocation4 + $0xf0] sm:$0xff]
    %v363 = vld [vmem:[#allocation4 + $0xf8] sm:$0xff]
    %v364 = vlaneseq
    %v365 = vand.u32 %v364, 127
    %v366 = vadd.s32 %v365, 128
    %v367 = vadd.s32 %v365, 256
    %v368 = vadd.s32 %v365, 384
    %vm369 = vcmp.ge.s32.totalorder %v365, 256
    %vm370 = vcmp.ge.s32.totalorder %v366, 256
    %vm371 = vcmp.ge.s32.totalorder %v367, 256
    %vm372 = vcmp.ge.s32.totalorder %v368, 256
    %vm373 = vcmp.lt.s32.totalorder %v365, 384
    %vm374 = vcmp.lt.s32.totalorder %v366, 384
    %vm375 = vcmp.lt.s32.totalorder %v367, 384
    %vm376 = vcmp.lt.s32.totalorder %v368, 384
    %vm377 = vmand %vm369, %vm373
    %vm378 = vmand %vm370, %vm374
    %vm379 = vmand %vm371, %vm375
    %vm380 = vmand %vm372, %vm376
    %v381 = vsel %vm377, 1.0, 0.5
    %v382 = vsel %vm378, 1.0, 0.5
    %v383 = vsel %vm379, 1.0, 0.5
    %v384 = vsel %vm380, 1.0, 0.5
    %v385 = vsel %vm377, 0.0, 0.5
    %v386 = vsel %vm378, 0.0, 0.5
    %v387 = vsel %vm379, 0.0, 0.5
    %v388 = vsel %vm380, 0.0, 0.5
    %v389 = vld [vmem:[#allocation2] sm:$0xff]
    %v390 = vld [vmem:[#allocation2 + $0x8] sm:$0xff]
    %v391 = vld [vmem:[#allocation2 + $0x10] sm:$0xff]
    %v392 = vld [vmem:[#allocation2 + $0x18] sm:$0xff]
    %v393 = vmul.f32 %v389, %v381
    %v394 = vmul.f32 %v390, %v382
    %v395 = vmul.f32 %v391, %v383
    %v396 = vmul.f32 %v392, %v384
    %v397 = vtanh.pop %v393
    %v398 = vtanh.pop %v394
    %v399 = vtanh.pop %v395
    %v400 = vtanh.pop %v396
    %v401 = vmul.f32 %v397, %v381
    %v402 = vmul.f32 %v398, %v382
    %v403 = vmul.f32 %v399, %v383
    %v404 = vmul.f32 %v400, %v384
    %v405 = vadd.f32 %v401, %v385
    %v406 = vadd.f32 %v402, %v386
    %v407 = vadd.f32 %v403, %v387
    %v408 = vadd.f32 %v404, %v388
    %v409 = vmul.f32 %v406, 0.0
    %v410 = vmul.f32 %v405, %v407
    %v411 = vadd.f32 %v409, %v410
    %v412 = vtanh.pop %v411
    %v413 = vmul.f32 %v408, %v412
    %vm414 = vcmp.ge.s32.totalorder %v365, 64
    %v415 = vsel %vm414, %v413, 0.0
    %v416 = vsel %vm414, %v411, 0.0
    %s417 = smul.u32 1, 4
    %s418 = smul.addr %s417, 8
    %s419 = scalar_lea.vmem [#allocation2], %s418
    %v420 = vld [vmem:[%s419] sm:$0xff]
    %v421 = vld [vmem:[%s419 + $0x8] sm:$0xff]
    %v422 = vld [vmem:[%s419 + $0x10] sm:$0xff]
    %v423 = vld [vmem:[%s419 + $0x18] sm:$0xff]
    %v424 = vpack.c.bf16 %v415, %v415
    %v457 = vunpack.c.l.b16 %v332
    %v458 = vunpack.c.h.b16 %v332
    %v459 = vunpack.c.l.b16 %v333
    %v460 = vunpack.c.h.b16 %v333
    %v461 = vunpack.c.l.b16 %v334
    %v462 = vunpack.c.h.b16 %v334
    %v463 = vunpack.c.l.b16 %v335
    %v464 = vunpack.c.h.b16 %v335
    %v465 = vunpack.c.l.b16 %v336
    %v466 = vunpack.c.h.b16 %v336
    %v467 = vunpack.c.l.b16 %v337
    %v468 = vunpack.c.h.b16 %v337
    %v469 = vunpack.c.l.b16 %v338
    %v470 = vunpack.c.h.b16 %v338
    %v471 = vunpack.c.l.b16 %v339
    %v472 = vunpack.c.h.b16 %v339
    %v473 = vunpack.c.l.b16 %v340
    %v474 = vunpack.c.h.b16 %v340
    %v475 = vunpack.c.l.b16 %v341
    %v476 = vunpack.c.h.b16 %v341
    %v477 = vunpack.c.l.b16 %v342
    %v478 = vunpack.c.h.b16 %v342
    %v479 = vunpack.c.l.b16 %v343
    %v480 = vunpack.c.h.b16 %v343
    %v481 = vunpack.c.l.b16 %v344
    %v482 = vunpack.c.h.b16 %v344
    %v483 = vunpack.c.l.b16 %v345
    %v484 = vunpack.c.h.b16 %v345
    %v485 = vunpack.c.l.b16 %v346
    %v486 = vunpack.c.h.b16 %v346
    %v487 = vunpack.c.l.b16 %v347
    %v488 = vunpack.c.h.b16 %v347
    %v489 = vunpack.c.l.b16 %v348
    %v490 = vunpack.c.h.b16 %v348
    %v491 = vunpack.c.l.b16 %v349
    %v492 = vunpack.c.h.b16 %v349
    %v493 = vunpack.c.l.b16 %v350
    %v494 = vunpack.c.h.b16 %v350
    %v495 = vunpack.c.l.b16 %v351
    %v496 = vunpack.c.h.b16 %v351
    %v497 = vunpack.c.l.b16 %v352
    %v498 = vunpack.c.h.b16 %v352
    %v499 = vunpack.c.l.b16 %v353
    %v500 = vunpack.c.h.b16 %v353
    %v501 = vunpack.c.l.b16 %v354
    %v502 = vunpack.c.h.b16 %v354
    %v503 = vunpack.c.l.b16 %v355
    %v504 = vunpack.c.h.b16 %v355
    %v505 = vunpack.c.l.b16 %v356
    %v506 = vunpack.c.h.b16 %v356
    %v507 = vunpack.c.l.b16 %v357
    %v508 = vunpack.c.h.b16 %v357
    %v509 = vunpack.c.l.b16 %v358
    %v510 = vunpack.c.h.b16 %v358
    %v511 = vunpack.c.l.b16 %v359
    %v512 = vunpack.c.h.b16 %v359
    %v513 = vunpack.c.l.b16 %v360
    %v514 = vunpack.c.h.b16 %v360
    %v515 = vunpack.c.l.b16 %v361
    %v516 = vunpack.c.h.b16 %v361
    %v517 = vunpack.c.l.b16 %v362
    %v518 = vunpack.c.h.b16 %v362
    %v519 = vunpack.c.l.b16 %v363
    %v520 = vunpack.c.h.b16 %v363
    %v521 = vpack.c.b16 %v461, %v457
    %v522 = vpack.c.b16 %v462, %v458
    %v523 = vpack.c.b16 %v463, %v459
    %v524 = vpack.c.b16 %v464, %v460
    %v525 = vpack.c.b16 %v469, %v465
    %v526 = vpack.c.b16 %v470, %v466
    %v527 = vpack.c.b16 %v471, %v467
    %v528 = vpack.c.b16 %v472, %v468
    %v529 = vpack.c.b16 %v477, %v473
    %v530 = vpack.c.b16 %v478, %v474
    %v531 = vpack.c.b16 %v479, %v475
    %v532 = vpack.c.b16 %v480, %v476
    %v533 = vpack.c.b16 %v485, %v481
    %v534 = vpack.c.b16 %v486, %v482
    %v535 = vpack.c.b16 %v487, %v483
    %v536 = vpack.c.b16 %v488, %v484
    %v537 = vpack.c.b16 %v493, %v489
    %v538 = vpack.c.b16 %v494, %v490
    %v539 = vpack.c.b16 %v495, %v491
    %v540 = vpack.c.b16 %v496, %v492
    %v541 = vpack.c.b16 %v501, %v497
    %v542 = vpack.c.b16 %v502, %v498
    %v543 = vpack.c.b16 %v503, %v499
    %v544 = vpack.c.b16 %v504, %v500
    %v545 = vpack.c.b16 %v509, %v505
    %v546 = vpack.c.b16 %v510, %v506
    %v547 = vpack.c.b16 %v511, %v507
    %v548 = vpack.c.b16 %v512, %v508
    %v549 = vpack.c.b16 %v517, %v513
    %v550 = vpack.c.b16 %v518, %v514
    %v551 = vpack.c.b16 %v519, %v515
    %v552 = vpack.c.b16 %v520, %v516
    %585 = vmatprep.subr.bf16.mxu0 %v550
    %586 = vmatpush1.bf16.msra.mxu0 %v549
    %587 = vmatprep.subr.bf16.mxu0 %v546
    %588 = vmatpush1.bf16.msra.mxu0 %v545
    %589 = vmatprep.subr.bf16.mxu0 %v542
    %590 = vmatpush1.bf16.msra.mxu0 %v541
    %591 = vmatprep.subr.bf16.mxu0 %v538
    %592 = vmatpush1.bf16.msra.mxu0 %v537
    %593 = vmatprep.subr.bf16.mxu0 %v534
    %594 = vmatpush1.bf16.msra.mxu0 %v533
    %595 = vmatprep.subr.bf16.mxu0 %v530
    %596 = vmatpush1.bf16.msra.mxu0 %v529
    %597 = vmatprep.subr.bf16.mxu0 %v526
    %598 = vmatpush1.bf16.msra.mxu0 %v525
    %599 = vmatprep.subr.bf16.mxu0 %v522
    %600 = vmatpush1.bf16.msra.mxu0 %v521
    %601 = vmatprep.subr.bf16.mxu0 0
    %602 = vmatpush2.bf16.msra.mxu0 0
    %603 = vmatprep.subr.bf16.mxu0 0
    %604 = vmatpush2.bf16.msra.mxu0 0
    %605 = vmatprep.subr.bf16.mxu0 0
    %606 = vmatpush2.bf16.msra.mxu0 0
    %607 = vmatprep.subr.bf16.mxu0 0
    %608 = vmatpush2.bf16.msra.mxu0 0
    %609 = vmatprep.subr.bf16.mxu0 0
    %610 = vmatpush2.bf16.msra.mxu0 0
    %611 = vmatprep.subr.bf16.mxu0 0
    %612 = vmatpush2.bf16.msra.mxu0 0
    %613 = vmatprep.subr.bf16.mxu0 0
    %614 = vmatpush2.bf16.msra.mxu0 0
    %615 = vmatprep.subr.bf16.mxu0 0
    %616 = vmatpush2.bf16.msra.mxu0 0
    %617 = vmatprep.mubr.bf16.mxu0 0
    %618 = vmatmul.mubr.bf16.gmra.mxu0 %v424
    %v619 = vpop.f32.mrf.mxu0
    %v620 = vadd.f32 %v420, %v619
    %v621 = vpop.f32.mrf.mxu0
    %v622 = vadd.f32 %v421, %v621
    %v623 = vpop.f32.mrf.mxu0
    %v624 = vpop.f32.mrf.mxu0
    %625 = vdwg.mxu0
    %626 = vmatprep.subr.bf16.mxu0 %v552
    %627 = vmatpush1.bf16.msra.mxu0 %v551
    %628 = vmatprep.subr.bf16.mxu0 %v548
    %629 = vmatpush1.bf16.msra.mxu0 %v547
    %630 = vmatprep.subr.bf16.mxu0 %v544
    %631 = vmatpush1.bf16.msra.mxu0 %v543
    %632 = vmatprep.subr.bf16.mxu0 %v540
    %633 = vmatpush1.bf16.msra.mxu0 %v539
    %634 = vmatprep.subr.bf16.mxu0 %v536
    %635 = vmatpush1.bf16.msra.mxu0 %v535
    %636 = vmatprep.subr.bf16.mxu0 %v532
    %637 = vmatpush1.bf16.msra.mxu0 %v531
    %638 = vmatprep.subr.bf16.mxu0 %v528
    %639 = vmatpush1.bf16.msra.mxu0 %v527
    %640 = vmatprep.subr.bf16.mxu0 %v524
    %641 = vmatpush1.bf16.msra.mxu0 %v523
    %642 = vmatprep.subr.bf16.mxu0 0
    %643 = vmatpush2.bf16.msra.mxu0 0
    %644 = vmatprep.subr.bf16.mxu0 0
    %645 = vmatpush2.bf16.msra.mxu0 0
    %646 = vmatprep.subr.bf16.mxu0 0
    %647 = vmatpush2.bf16.msra.mxu0 0
    %648 = vmatprep.subr.bf16.mxu0 0
    %649 = vmatpush2.bf16.msra.mxu0 0
    %650 = vmatprep.subr.bf16.mxu0 0
    %651 = vmatpush2.bf16.msra.mxu0 0
    %652 = vmatprep.subr.bf16.mxu0 0
    %653 = vmatpush2.bf16.msra.mxu0 0
    %654 = vmatprep.subr.bf16.mxu0 0
    %655 = vmatpush2.bf16.msra.mxu0 0
    %656 = vmatprep.subr.bf16.mxu0 0
    %657 = vmatpush2.bf16.msra.mxu0 0
    %658 = vmatprep.mubr.bf16.mxu0 0
    %659 = vmatmul.mubr.bf16.gmra.mxu0 %v424
    %v660 = vpop.f32.mrf.mxu0
    %v661 = vadd.f32 %v422, %v660
    %v662 = vpop.f32.mrf.mxu0
    %v663 = vadd.f32 %v423, %v662
    %v664 = vpop.f32.mrf.mxu0
    %v665 = vpop.f32.mrf.mxu0
    %666 = vdwg.mxu0
    %v667 = vmul.f32 %v620, %v381
    %v668 = vmul.f32 %v622, %v382
    %v669 = vmul.f32 %v661, %v383
    %v670 = vmul.f32 %v663, %v384
    %v671 = vtanh.pop %v667
    %v672 = vtanh.pop %v668
    %v673 = vtanh.pop %v669
    %v674 = vtanh.pop %v670
    %v675 = vmul.f32 %v671, %v381
    %v676 = vmul.f32 %v672, %v382
    %v677 = vmul.f32 %v673, %v383
    %v678 = vmul.f32 %v674, %v384
    %v679 = vadd.f32 %v675, %v385
    %v680 = vadd.f32 %v676, %v386
    %v681 = vadd.f32 %v677, %v387
    %v682 = vadd.f32 %v678, %v388
    %v683 = vmul.f32 %v680, %v416
    %v684 = vmul.f32 %v679, %v681
    %v685 = vadd.f32 %v683, %v684
    %v686 = vtanh.pop %v685
    %v687 = vmul.f32 %v682, %v686
    %s688 = smul.u32 2, 4
    %s689 = smul.addr %s688, 8
    %s690 = scalar_lea.vmem [#allocation2], %s689
    %v691 = vld [vmem:[%s690] sm:$0xff]
    %v692 = vld [vmem:[%s690 + $0x8] sm:$0xff]
    %v693 = vld [vmem:[%s690 + $0x10] sm:$0xff]
    %v694 = vld [vmem:[%s690 + $0x18] sm:$0xff]
    %v695 = vpack.c.bf16 %v687, %v687
    %696 = vmatprep.subr.bf16.mxu0 %v550
    %697 = vmatpush1.bf16.msra.mxu0 %v549
    %698 = vmatprep.subr.bf16.mxu0 %v546
    %699 = vmatpush1.bf16.msra.mxu0 %v545
    %700 = vmatprep.subr.bf16.mxu0 %v542
    %701 = vmatpush1.bf16.msra.mxu0 %v541
    %702 = vmatprep.subr.bf16.mxu0 %v538
    %703 = vmatpush1.bf16.msra.mxu0 %v537
    %704 = vmatprep.subr.bf16.mxu0 %v534
    %705 = vmatpush1.bf16.msra.mxu0 %v533
    %706 = vmatprep.subr.bf16.mxu0 %v530
    %707 = vmatpush1.bf16.msra.mxu0 %v529
    %708 = vmatprep.subr.bf16.mxu0 %v526
    %709 = vmatpush1.bf16.msra.mxu0 %v525
    %710 = vmatprep.subr.bf16.mxu0 %v522
    %711 = vmatpush1.bf16.msra.mxu0 %v521
    %712 = vmatprep.subr.bf16.mxu0 0
    %713 = vmatpush2.bf16.msra.mxu0 0
    %714 = vmatprep.subr.bf16.mxu0 0
    %715 = vmatpush2.bf16.msra.mxu0 0
    %716 = vmatprep.subr.bf16.mxu0 0
    %717 = vmatpush2.bf16.msra.mxu0 0
    %718 = vmatprep.subr.bf16.mxu0 0
    %719 = vmatpush2.bf16.msra.mxu0 0
    %720 = vmatprep.subr.bf16.mxu0 0
    %721 = vmatpush2.bf16.msra.mxu0 0
    %722 = vmatprep.subr.bf16.mxu0 0
    %723 = vmatpush2.bf16.msra.mxu0 0
    %724 = vmatprep.subr.bf16.mxu0 0
    %725 = vmatpush2.bf16.msra.mxu0 0
    %726 = vmatprep.subr.bf16.mxu0 0
    %727 = vmatpush2.bf16.msra.mxu0 0
    %728 = vmatprep.mubr.bf16.mxu0 0
    %729 = vmatmul.mubr.bf16.gmra.mxu0 %v695
    %v730 = vpop.f32.mrf.mxu0
    %v731 = vadd.f32 %v691, %v730
    %v732 = vpop.f32.mrf.mxu0
    %v733 = vadd.f32 %v692, %v732
    %v734 = vpop.f32.mrf.mxu0
    %v735 = vpop.f32.mrf.mxu0
    %736 = vdwg.mxu0
    %737 = vmatprep.subr.bf16.mxu0 %v552
    %738 = vmatpush1.bf16.msra.mxu0 %v551
    %739 = vmatprep.subr.bf16.mxu0 %v548
    %740 = vmatpush1.bf16.msra.mxu0 %v547
    %741 = vmatprep.subr.bf16.mxu0 %v544
    %742 = vmatpush1.bf16.msra.mxu0 %v543
    %743 = vmatprep.subr.bf16.mxu0 %v540
    %744 = vmatpush1.bf16.msra.mxu0 %v539
    %745 = vmatprep.subr.bf16.mxu0 %v536
    %746 = vmatpush1.bf16.msra.mxu0 %v535
    %747 = vmatprep.subr.bf16.mxu0 %v532
    %748 = vmatpush1.bf16.msra.mxu0 %v531
    %749 = vmatprep.subr.bf16.mxu0 %v528
    %750 = vmatpush1.bf16.msra.mxu0 %v527
    %751 = vmatprep.subr.bf16.mxu0 %v524
    %752 = vmatpush1.bf16.msra.mxu0 %v523
    %753 = vmatprep.subr.bf16.mxu0 0
    %754 = vmatpush2.bf16.msra.mxu0 0
    %755 = vmatprep.subr.bf16.mxu0 0
    %756 = vmatpush2.bf16.msra.mxu0 0
    %757 = vmatprep.subr.bf16.mxu0 0
    %758 = vmatpush2.bf16.msra.mxu0 0
    %759 = vmatprep.subr.bf16.mxu0 0
    %760 = vmatpush2.bf16.msra.mxu0 0
    %761 = vmatprep.subr.bf16.mxu0 0
    %762 = vmatpush2.bf16.msra.mxu0 0
    %763 = vmatprep.subr.bf16.mxu0 0
    %764 = vmatpush2.bf16.msra.mxu0 0
    %765 = vmatprep.subr.bf16.mxu0 0
    %766 = vmatpush2.bf16.msra.mxu0 0
    %767 = vmatprep.subr.bf16.mxu0 0
    %768 = vmatpush2.bf16.msra.mxu0 0
    %769 = vmatprep.mubr.bf16.mxu0 0
    %770 = vmatmul.mubr.bf16.gmra.mxu0 %v695
    %v771 = vpop.f32.mrf.mxu0
    %v772 = vadd.f32 %v693, %v771
    %v773 = vpop.f32.mrf.mxu0
    %v774 = vadd.f32 %v694, %v773
    %v775 = vpop.f32.mrf.mxu0
    %v776 = vpop.f32.mrf.mxu0
    %777 = vdwg.mxu0
    %v778 = vmul.f32 %v731, %v381
    %v779 = vmul.f32 %v733, %v382
    %v780 = vmul.f32 %v772, %v383
    %v781 = vmul.f32 %v774, %v384
    %v782 = vtanh.pop %v778
    %v783 = vtanh.pop %v779
    %v784 = vtanh.pop %v780
    %v785 = vtanh.pop %v781
    %v786 = vmul.f32 %v782, %v381
    %v787 = vmul.f32 %v783, %v382
    %v788 = vmul.f32 %v784, %v383
    %v789 = vmul.f32 %v785, %v384
    %v790 = vadd.f32 %v786, %v385
    %v791 = vadd.f32 %v787, %v386
    %v792 = vadd.f32 %v788, %v387
    %v793 = vadd.f32 %v789, %v388
    %v794 = vmul.f32 %v791, %v685
    %v795 = vmul.f32 %v790, %v792
    %v796 = vadd.f32 %v794, %v795
    %v797 = vtanh.pop %v796
    %v798 = vmul.f32 %v793, %v797
    %s799 = smul.u32 3, 4
    %s800 = smul.addr %s799, 8
    %s801 = scalar_lea.vmem [#allocation2], %s800
    %v802 = vld [vmem:[%s801] sm:$0xff]
    %v803 = vld [vmem:[%s801 + $0x8] sm:$0xff]
    %v804 = vld [vmem:[%s801 + $0x10] sm:$0xff]
    %v805 = vld [vmem:[%s801 + $0x18] sm:$0xff]
    %v806 = vpack.c.bf16 %v798, %v798
    %807 = vmatprep.subr.bf16.mxu0 %v550
    %808 = vmatpush1.bf16.msra.mxu0 %v549
    %809 = vmatprep.subr.bf16.mxu0 %v546
    %810 = vmatpush1.bf16.msra.mxu0 %v545
    %811 = vmatprep.subr.bf16.mxu0 %v542
    %812 = vmatpush1.bf16.msra.mxu0 %v541
    %813 = vmatprep.subr.bf16.mxu0 %v538
    %814 = vmatpush1.bf16.msra.mxu0 %v537
    %815 = vmatprep.subr.bf16.mxu0 %v534
    %816 = vmatpush1.bf16.msra.mxu0 %v533
    %817 = vmatprep.subr.bf16.mxu0 %v530
    %818 = vmatpush1.bf16.msra.mxu0 %v529
    %819 = vmatprep.subr.bf16.mxu0 %v526
    %820 = vmatpush1.bf16.msra.mxu0 %v525
    %821 = vmatprep.subr.bf16.mxu0 %v522
    %822 = vmatpush1.bf16.msra.mxu0 %v521
    %823 = vmatprep.subr.bf16.mxu0 0
    %824 = vmatpush2.bf16.msra.mxu0 0
    %825 = vmatprep.subr.bf16.mxu0 0
    %826 = vmatpush2.bf16.msra.mxu0 0
    %827 = vmatprep.subr.bf16.mxu0 0
    %828 = vmatpush2.bf16.msra.mxu0 0
    %829 = vmatprep.subr.bf16.mxu0 0
    %830 = vmatpush2.bf16.msra.mxu0 0
    %831 = vmatprep.subr.bf16.mxu0 0
    %832 = vmatpush2.bf16.msra.mxu0 0
    %833 = vmatprep.subr.bf16.mxu0 0
    %834 = vmatpush2.bf16.msra.mxu0 0
    %835 = vmatprep.subr.bf16.mxu0 0
    %836 = vmatpush2.bf16.msra.mxu0 0
    %837 = vmatprep.subr.bf16.mxu0 0
    %838 = vmatpush2.bf16.msra.mxu0 0
    %839 = vmatprep.mubr.bf16.mxu0 0
    %840 = vmatmul.mubr.bf16.gmra.mxu0 %v806
    %v841 = vpop.f32.mrf.mxu0
    %v842 = vadd.f32 %v802, %v841
    %v843 = vpop.f32.mrf.mxu0
    %v844 = vadd.f32 %v803, %v843
    %v845 = vpop.f32.mrf.mxu0
    %v846 = vpop.f32.mrf.mxu0
    %847 = vdwg.mxu0
    %848 = vmatprep.subr.bf16.mxu0 %v552
    %849 = vmatpush1.bf16.msra.mxu0 %v551
    %850 = vmatprep.subr.bf16.mxu0 %v548
    %851 = vmatpush1.bf16.msra.mxu0 %v547
    %852 = vmatprep.subr.bf16.mxu0 %v544
    %853 = vmatpush1.bf16.msra.mxu0 %v543
    %854 = vmatprep.subr.bf16.mxu0 %v540
    %855 = vmatpush1.bf16.msra.mxu0 %v539
    %856 = vmatprep.subr.bf16.mxu0 %v536
    %857 = vmatpush1.bf16.msra.mxu0 %v535
    %858 = vmatprep.subr.bf16.mxu0 %v532
    %859 = vmatpush1.bf16.msra.mxu0 %v531
    %860 = vmatprep.subr.bf16.mxu0 %v528
    %861 = vmatpush1.bf16.msra.mxu0 %v527
    %862 = vmatprep.subr.bf16.mxu0 %v524
    %863 = vmatpush1.bf16.msra.mxu0 %v523
    %864 = vmatprep.subr.bf16.mxu0 0
    %865 = vmatpush2.bf16.msra.mxu0 0
    %866 = vmatprep.subr.bf16.mxu0 0
    %867 = vmatpush2.bf16.msra.mxu0 0
    %868 = vmatprep.subr.bf16.mxu0 0
    %869 = vmatpush2.bf16.msra.mxu0 0
    %870 = vmatprep.subr.bf16.mxu0 0
    %871 = vmatpush2.bf16.msra.mxu0 0
    %872 = vmatprep.subr.bf16.mxu0 0
    %873 = vmatpush2.bf16.msra.mxu0 0
    %874 = vmatprep.subr.bf16.mxu0 0
    %875 = vmatpush2.bf16.msra.mxu0 0
    %876 = vmatprep.subr.bf16.mxu0 0
    %877 = vmatpush2.bf16.msra.mxu0 0
    %878 = vmatprep.subr.bf16.mxu0 0
    %879 = vmatpush2.bf16.msra.mxu0 0
    %880 = vmatprep.mubr.bf16.mxu0 0
    %881 = vmatmul.mubr.bf16.gmra.mxu0 %v806
    %v882 = vpop.f32.mrf.mxu0
    %v883 = vadd.f32 %v804, %v882
    %v884 = vpop.f32.mrf.mxu0
    %v885 = vadd.f32 %v805, %v884
    %v886 = vpop.f32.mrf.mxu0
    %v887 = vpop.f32.mrf.mxu0
    %888 = vdwg.mxu0
    %v889 = vmul.f32 %v842, %v381
    %v890 = vmul.f32 %v844, %v382
    %v891 = vmul.f32 %v883, %v383
    %v892 = vmul.f32 %v885, %v384
    %v893 = vtanh.pop %v889
    %v894 = vtanh.pop %v890
    %v895 = vtanh.pop %v891
    %v896 = vtanh.pop %v892
    %v897 = vmul.f32 %v893, %v381
    %v898 = vmul.f32 %v894, %v382
    %v899 = vmul.f32 %v895, %v383
    %v900 = vmul.f32 %v896, %v384
    %v901 = vadd.f32 %v897, %v385
    %v902 = vadd.f32 %v898, %v386
    %v903 = vadd.f32 %v899, %v387
    %v904 = vadd.f32 %v900, %v388
    %v905 = vmul.f32 %v902, %v796
    %v906 = vmul.f32 %v901, %v903
    %v907 = vadd.f32 %v905, %v906
    %v908 = vtanh.pop %v907
    %v909 = vmul.f32 %v904, %v908
    %s910 = smul.u32 4, 4
    %s911 = smul.addr %s910, 8
    %s912 = scalar_lea.vmem [#allocation2], %s911
    %v913 = vld [vmem:[%s912] sm:$0xff]
    %v914 = vld [vmem:[%s912 + $0x8] sm:$0xff]
    %v915 = vld [vmem:[%s912 + $0x10] sm:$0xff]
    %v916 = vld [vmem:[%s912 + $0x18] sm:$0xff]
    %v917 = vpack.c.bf16 %v909, %v909
    %918 = vmatprep.subr.bf16.mxu0 %v550
    %919 = vmatpush1.bf16.msra.mxu0 %v549
    %920 = vmatprep.subr.bf16.mxu0 %v546
    %921 = vmatpush1.bf16.msra.mxu0 %v545
    %922 = vmatprep.subr.bf16.mxu0 %v542
    %923 = vmatpush1.bf16.msra.mxu0 %v541
    %924 = vmatprep.subr.bf16.mxu0 %v538
    %925 = vmatpush1.bf16.msra.mxu0 %v537
    %926 = vmatprep.subr.bf16.mxu0 %v534
    %927 = vmatpush1.bf16.msra.mxu0 %v533
    %928 = vmatprep.subr.bf16.mxu0 %v530
    %929 = vmatpush1.bf16.msra.mxu0 %v529
    %930 = vmatprep.subr.bf16.mxu0 %v526
    %931 = vmatpush1.bf16.msra.mxu0 %v525
    %932 = vmatprep.subr.bf16.mxu0 %v522
    %933 = vmatpush1.bf16.msra.mxu0 %v521
    %934 = vmatprep.subr.bf16.mxu0 0
    %935 = vmatpush2.bf16.msra.mxu0 0
    %936 = vmatprep.subr.bf16.mxu0 0
    %937 = vmatpush2.bf16.msra.mxu0 0
    %938 = vmatprep.subr.bf16.mxu0 0
    %939 = vmatpush2.bf16.msra.mxu0 0
    %940 = vmatprep.subr.bf16.mxu0 0
    %941 = vmatpush2.bf16.msra.mxu0 0
    %942 = vmatprep.subr.bf16.mxu0 0
    %943 = vmatpush2.bf16.msra.mxu0 0
    %944 = vmatprep.subr.bf16.mxu0 0
    %945 = vmatpush2.bf16.msra.mxu0 0
    %946 = vmatprep.subr.bf16.mxu0 0
    %947 = vmatpush2.bf16.msra.mxu0 0
    %948 = vmatprep.subr.bf16.mxu0 0
    %949 = vmatpush2.bf16.msra.mxu0 0
    %950 = vmatprep.mubr.bf16.mxu0 0
    %951 = vmatmul.mubr.bf16.gmra.mxu0 %v917
    %v952 = vpop.f32.mrf.mxu0
    %v953 = vadd.f32 %v913, %v952
    %v954 = vpop.f32.mrf.mxu0
    %v955 = vadd.f32 %v914, %v954
    %v956 = vpop.f32.mrf.mxu0
    %v957 = vpop.f32.mrf.mxu0
    %958 = vdwg.mxu0
    %959 = vmatprep.subr.bf16.mxu0 %v552
    %960 = vmatpush1.bf16.msra.mxu0 %v551
    %961 = vmatprep.subr.bf16.mxu0 %v548
    %962 = vmatpush1.bf16.msra.mxu0 %v547
    %963 = vmatprep.subr.bf16.mxu0 %v544
    %964 = vmatpush1.bf16.msra.mxu0 %v543
    %965 = vmatprep.subr.bf16.mxu0 %v540
    %966 = vmatpush1.bf16.msra.mxu0 %v539
    %967 = vmatprep.subr.bf16.mxu0 %v536
    %968 = vmatpush1.bf16.msra.mxu0 %v535
    %969 = vmatprep.subr.bf16.mxu0 %v532
    %970 = vmatpush1.bf16.msra.mxu0 %v531
    %971 = vmatprep.subr.bf16.mxu0 %v528
    %972 = vmatpush1.bf16.msra.mxu0 %v527
    %973 = vmatprep.subr.bf16.mxu0 %v524
    %974 = vmatpush1.bf16.msra.mxu0 %v523
    %975 = vmatprep.subr.bf16.mxu0 0
    %976 = vmatpush2.bf16.msra.mxu0 0
    %977 = vmatprep.subr.bf16.mxu0 0
    %978 = vmatpush2.bf16.msra.mxu0 0
    %979 = vmatprep.subr.bf16.mxu0 0
    %980 = vmatpush2.bf16.msra.mxu0 0
    %981 = vmatprep.subr.bf16.mxu0 0
    %982 = vmatpush2.bf16.msra.mxu0 0
    %983 = vmatprep.subr.bf16.mxu0 0
    %984 = vmatpush2.bf16.msra.mxu0 0
    %985 = vmatprep.subr.bf16.mxu0 0
    %986 = vmatpush2.bf16.msra.mxu0 0
    %987 = vmatprep.subr.bf16.mxu0 0
    %988 = vmatpush2.bf16.msra.mxu0 0
    %989 = vmatprep.subr.bf16.mxu0 0
    %990 = vmatpush2.bf16.msra.mxu0 0
    %991 = vmatprep.mubr.bf16.mxu0 0
    %992 = vmatmul.mubr.bf16.gmra.mxu0 %v917
    %v993 = vpop.f32.mrf.mxu0
    %v994 = vadd.f32 %v915, %v993
    %v995 = vpop.f32.mrf.mxu0
    %v996 = vadd.f32 %v916, %v995
    %v997 = vpop.f32.mrf.mxu0
    %v998 = vpop.f32.mrf.mxu0
    %999 = vdwg.mxu0
    %v1000 = vmul.f32 %v953, %v381
    %v1001 = vmul.f32 %v955, %v382
    %v1002 = vmul.f32 %v994, %v383
    %v1003 = vmul.f32 %v996, %v384
    %v1004 = vtanh.pop %v1000
    %v1005 = vtanh.pop %v1001
    %v1006 = vtanh.pop %v1002
    %v1007 = vtanh.pop %v1003
    %v1008 = vmul.f32 %v1004, %v381
    %v1009 = vmul.f32 %v1005, %v382
    %v1010 = vmul.f32 %v1006, %v383
    %v1011 = vmul.f32 %v1007, %v384
    %v1012 = vadd.f32 %v1008, %v385
    %v1013 = vadd.f32 %v1009, %v386
    %v1014 = vadd.f32 %v1010, %v387
    %v1015 = vadd.f32 %v1011, %v388
    %v1016 = vmul.f32 %v1013, %v907
    %v1017 = vmul.f32 %v1012, %v1014
    %v1018 = vadd.f32 %v1016, %v1017
    %v1019 = vtanh.pop %v1018
    %v1020 = vmul.f32 %v1015, %v1019
    %s1021 = smul.u32 5, 4
    %s1022 = smul.addr %s1021, 8
    %s1023 = scalar_lea.vmem [#allocation2], %s1022
    %v1024 = vld [vmem:[%s1023] sm:$0xff]
    %v1025 = vld [vmem:[%s1023 + $0x8] sm:$0xff]
    %v1026 = vld [vmem:[%s1023 + $0x10] sm:$0xff]
    %v1027 = vld [vmem:[%s1023 + $0x18] sm:$0xff]
    %v1028 = vpack.c.bf16 %v1020, %v1020
    %1029 = vmatprep.subr.bf16.mxu0 %v550
    %1030 = vmatpush1.bf16.msra.mxu0 %v549
    %1031 = vmatprep.subr.bf16.mxu0 %v546
    %1032 = vmatpush1.bf16.msra.mxu0 %v545
    %1033 = vmatprep.subr.bf16.mxu0 %v542
    %1034 = vmatpush1.bf16.msra.mxu0 %v541
    %1035 = vmatprep.subr.bf16.mxu0 %v538
    %1036 = vmatpush1.bf16.msra.mxu0 %v537
    %1037 = vmatprep.subr.bf16.mxu0 %v534
    %1038 = vmatpush1.bf16.msra.mxu0 %v533
    %1039 = vmatprep.subr.bf16.mxu0 %v530
    %1040 = vmatpush1.bf16.msra.mxu0 %v529
    %1041 = vmatprep.subr.bf16.mxu0 %v526
    %1042 = vmatpush1.bf16.msra.mxu0 %v525
    %1043 = vmatprep.subr.bf16.mxu0 %v522
    %1044 = vmatpush1.bf16.msra.mxu0 %v521
    %1045 = vmatprep.subr.bf16.mxu0 0
    %1046 = vmatpush2.bf16.msra.mxu0 0
    %1047 = vmatprep.subr.bf16.mxu0 0
    %1048 = vmatpush2.bf16.msra.mxu0 0
    %1049 = vmatprep.subr.bf16.mxu0 0
    %1050 = vmatpush2.bf16.msra.mxu0 0
    %1051 = vmatprep.subr.bf16.mxu0 0
    %1052 = vmatpush2.bf16.msra.mxu0 0
    %1053 = vmatprep.subr.bf16.mxu0 0
    %1054 = vmatpush2.bf16.msra.mxu0 0
    %1055 = vmatprep.subr.bf16.mxu0 0
    %1056 = vmatpush2.bf16.msra.mxu0 0
    %1057 = vmatprep.subr.bf16.mxu0 0
    %1058 = vmatpush2.bf16.msra.mxu0 0
    %1059 = vmatprep.subr.bf16.mxu0 0
    %1060 = vmatpush2.bf16.msra.mxu0 0
    %1061 = vmatprep.mubr.bf16.mxu0 0
    %1062 = vmatmul.mubr.bf16.gmra.mxu0 %v1028
    %v1063 = vpop.f32.mrf.mxu0
    %v1064 = vadd.f32 %v1024, %v1063
    %v1065 = vpop.f32.mrf.mxu0
    %v1066 = vadd.f32 %v1025, %v1065
    %v1067 = vpop.f32.mrf.mxu0
    %v1068 = vpop.f32.mrf.mxu0
    %1069 = vdwg.mxu0
    %1070 = vmatprep.subr.bf16.mxu0 %v552
    %1071 = vmatpush1.bf16.msra.mxu0 %v551
    %1072 = vmatprep.subr.bf16.mxu0 %v548
    %1073 = vmatpush1.bf16.msra.mxu0 %v547
    %1074 = vmatprep.subr.bf16.mxu0 %v544
    %1075 = vmatpush1.bf16.msra.mxu0 %v543
    %1076 = vmatprep.subr.bf16.mxu0 %v540
    %1077 = vmatpush1.bf16.msra.mxu0 %v539
    %1078 = vmatprep.subr.bf16.mxu0 %v536
    %1079 = vmatpush1.bf16.msra.mxu0 %v535
    %1080 = vmatprep.subr.bf16.mxu0 %v532
    %1081 = vmatpush1.bf16.msra.mxu0 %v531
    %1082 = vmatprep.subr.bf16.mxu0 %v528
    %1083 = vmatpush1.bf16.msra.mxu0 %v527
    %1084 = vmatprep.subr.bf16.mxu0 %v524
    %1085 = vmatpush1.bf16.msra.mxu0 %v523
    %1086 = vmatprep.subr.bf16.mxu0 0
    %1087 = vmatpush2.bf16.msra.mxu0 0
    %1088 = vmatprep.subr.bf16.mxu0 0
    %1089 = vmatpush2.bf16.msra.mxu0 0
    %1090 = vmatprep.subr.bf16.mxu0 0
    %1091 = vmatpush2.bf16.msra.mxu0 0
    %1092 = vmatprep.subr.bf16.mxu0 0
    %1093 = vmatpush2.bf16.msra.mxu0 0
    %1094 = vmatprep.subr.bf16.mxu0 0
    %1095 = vmatpush2.bf16.msra.mxu0 0
    %1096 = vmatprep.subr.bf16.mxu0 0
    %1097 = vmatpush2.bf16.msra.mxu0 0
    %1098 = vmatprep.subr.bf16.mxu0 0
    %1099 = vmatpush2.bf16.msra.mxu0 0
    %1100 = vmatprep.subr.bf16.mxu0 0
    %1101 = vmatpush2.bf16.msra.mxu0 0
    %1102 = vmatprep.mubr.bf16.mxu0 0
    %1103 = vmatmul.mubr.bf16.gmra.mxu0 %v1028
    %v1104 = vpop.f32.mrf.mxu0
    %v1105 = vadd.f32 %v1026, %v1104
    %v1106 = vpop.f32.mrf.mxu0
    %v1107 = vadd.f32 %v1027, %v1106
    %v1108 = vpop.f32.mrf.mxu0
    %v1109 = vpop.f32.mrf.mxu0
    %1110 = vdwg.mxu0
    %v1111 = vmul.f32 %v1064, %v381
    %v1112 = vmul.f32 %v1066, %v382
    %v1113 = vmul.f32 %v1105, %v383
    %v1114 = vmul.f32 %v1107, %v384
    %v1115 = vtanh.pop %v1111
    %v1116 = vtanh.pop %v1112
    %v1117 = vtanh.pop %v1113
    %v1118 = vtanh.pop %v1114
    %v1119 = vmul.f32 %v1115, %v381
    %v1120 = vmul.f32 %v1116, %v382
    %v1121 = vmul.f32 %v1117, %v383
    %v1122 = vmul.f32 %v1118, %v384
    %v1123 = vadd.f32 %v1119, %v385
    %v1124 = vadd.f32 %v1120, %v386
    %v1125 = vadd.f32 %v1121, %v387
    %v1126 = vadd.f32 %v1122, %v388
    %v1127 = vmul.f32 %v1124, %v1018
    %v1128 = vmul.f32 %v1123, %v1125
    %v1129 = vadd.f32 %v1127, %v1128
    %v1130 = vtanh.pop %v1129
    %v1131 = vmul.f32 %v1126, %v1130
    %s1132 = smul.u32 6, 4
    %s1133 = smul.addr %s1132, 8
    %s1134 = scalar_lea.vmem [#allocation2], %s1133
    %v1135 = vld [vmem:[%s1134] sm:$0xff]
    %v1136 = vld [vmem:[%s1134 + $0x8] sm:$0xff]
    %v1137 = vld [vmem:[%s1134 + $0x10] sm:$0xff]
    %v1138 = vld [vmem:[%s1134 + $0x18] sm:$0xff]
    %v1139 = vpack.c.bf16 %v1131, %v1131
    %1140 = vmatprep.subr.bf16.mxu0 %v550
    %1141 = vmatpush1.bf16.msra.mxu0 %v549
    %1142 = vmatprep.subr.bf16.mxu0 %v546
    %1143 = vmatpush1.bf16.msra.mxu0 %v545
    %1144 = vmatprep.subr.bf16.mxu0 %v542
    %1145 = vmatpush1.bf16.msra.mxu0 %v541
    %1146 = vmatprep.subr.bf16.mxu0 %v538
    %1147 = vmatpush1.bf16.msra.mxu0 %v537
    %1148 = vmatprep.subr.bf16.mxu0 %v534
    %1149 = vmatpush1.bf16.msra.mxu0 %v533
    %1150 = vmatprep.subr.bf16.mxu0 %v530
    %1151 = vmatpush1.bf16.msra.mxu0 %v529
    %1152 = vmatprep.subr.bf16.mxu0 %v526
    %1153 = vmatpush1.bf16.msra.mxu0 %v525
    %1154 = vmatprep.subr.bf16.mxu0 %v522
    %1155 = vmatpush1.bf16.msra.mxu0 %v521
    %1156 = vmatprep.subr.bf16.mxu0 0
    %1157 = vmatpush2.bf16.msra.mxu0 0
    %1158 = vmatprep.subr.bf16.mxu0 0
    %1159 = vmatpush2.bf16.msra.mxu0 0
    %1160 = vmatprep.subr.bf16.mxu0 0
    %1161 = vmatpush2.bf16.msra.mxu0 0
    %1162 = vmatprep.subr.bf16.mxu0 0
    %1163 = vmatpush2.bf16.msra.mxu0 0
    %1164 = vmatprep.subr.bf16.mxu0 0
    %1165 = vmatpush2.bf16.msra.mxu0 0
    %1166 = vmatprep.subr.bf16.mxu0 0
    %1167 = vmatpush2.bf16.msra.mxu0 0
    %1168 = vmatprep.subr.bf16.mxu0 0
    %1169 = vmatpush2.bf16.msra.mxu0 0
    %1170 = vmatprep.subr.bf16.mxu0 0
    %1171 = vmatpush2.bf16.msra.mxu0 0
    %1172 = vmatprep.mubr.bf16.mxu0 0
    %1173 = vmatmul.mubr.bf16.gmra.mxu0 %v1139
    %v1174 = vpop.f32.mrf.mxu0
    %v1175 = vadd.f32 %v1135, %v1174
    %v1176 = vpop.f32.mrf.mxu0
    %v1177 = vadd.f32 %v1136, %v1176
    %v1178 = vpop.f32.mrf.mxu0
    %v1179 = vpop.f32.mrf.mxu0
    %1180 = vdwg.mxu0
    %1181 = vmatprep.subr.bf16.mxu0 %v552
    %1182 = vmatpush1.bf16.msra.mxu0 %v551
    %1183 = vmatprep.subr.bf16.mxu0 %v548
    %1184 = vmatpush1.bf16.msra.mxu0 %v547
    %1185 = vmatprep.subr.bf16.mxu0 %v544
    %1186 = vmatpush1.bf16.msra.mxu0 %v543
    %1187 = vmatprep.subr.bf16.mxu0 %v540
    %1188 = vmatpush1.bf16.msra.mxu0 %v539
    %1189 = vmatprep.subr.bf16.mxu0 %v536
    %1190 = vmatpush1.bf16.msra.mxu0 %v535
    %1191 = vmatprep.subr.bf16.mxu0 %v532
    %1192 = vmatpush1.bf16.msra.mxu0 %v531
    %1193 = vmatprep.subr.bf16.mxu0 %v528
    %1194 = vmatpush1.bf16.msra.mxu0 %v527
    %1195 = vmatprep.subr.bf16.mxu0 %v524
    %1196 = vmatpush1.bf16.msra.mxu0 %v523
    %1197 = vmatprep.subr.bf16.mxu0 0
    %1198 = vmatpush2.bf16.msra.mxu0 0
    %1199 = vmatprep.subr.bf16.mxu0 0
    %1200 = vmatpush2.bf16.msra.mxu0 0
    %1201 = vmatprep.subr.bf16.mxu0 0
    %1202 = vmatpush2.bf16.msra.mxu0 0
    %1203 = vmatprep.subr.bf16.mxu0 0
    %1204 = vmatpush2.bf16.msra.mxu0 0
    %1205 = vmatprep.subr.bf16.mxu0 0
    %1206 = vmatpush2.bf16.msra.mxu0 0
    %1207 = vmatprep.subr.bf16.mxu0 0
    %1208 = vmatpush2.bf16.msra.mxu0 0
    %1209 = vmatprep.subr.bf16.mxu0 0
    %1210 = vmatpush2.bf16.msra.mxu0 0
    %1211 = vmatprep.subr.bf16.mxu0 0
    %1212 = vmatpush2.bf16.msra.mxu0 0
    %1213 = vmatprep.mubr.bf16.mxu0 0
    %1214 = vmatmul.mubr.bf16.gmra.mxu0 %v1139
    %v1215 = vpop.f32.mrf.mxu0
    %v1216 = vadd.f32 %v1137, %v1215
    %v1217 = vpop.f32.mrf.mxu0
    %v1218 = vadd.f32 %v1138, %v1217
    %v1219 = vpop.f32.mrf.mxu0
    %v1220 = vpop.f32.mrf.mxu0
    %1221 = vdwg.mxu0
    %v1222 = vmul.f32 %v1175, %v381
    %v1223 = vmul.f32 %v1177, %v382
    %v1224 = vmul.f32 %v1216, %v383
    %v1225 = vmul.f32 %v1218, %v384
    %v1226 = vtanh.pop %v1222
    %v1227 = vtanh.pop %v1223
    %v1228 = vtanh.pop %v1224
    %v1229 = vtanh.pop %v1225
    %v1230 = vmul.f32 %v1226, %v381
    %v1231 = vmul.f32 %v1227, %v382
    %v1232 = vmul.f32 %v1228, %v383
    %v1233 = vmul.f32 %v1229, %v384
    %v1234 = vadd.f32 %v1230, %v385
    %v1235 = vadd.f32 %v1231, %v386
    %v1236 = vadd.f32 %v1232, %v387
    %v1237 = vadd.f32 %v1233, %v388
    %v1238 = vmul.f32 %v1235, %v1129
    %v1239 = vmul.f32 %v1234, %v1236
    %v1240 = vadd.f32 %v1238, %v1239
    %v1241 = vtanh.pop %v1240
    %v1242 = vmul.f32 %v1237, %v1241
    %s1243 = smul.u32 7, 4
    %s1244 = smul.addr %s1243, 8
    %s1245 = scalar_lea.vmem [#allocation2], %s1244
    %v1246 = vld [vmem:[%s1245] sm:$0xff]
    %v1247 = vld [vmem:[%s1245 + $0x8] sm:$0xff]
    %v1248 = vld [vmem:[%s1245 + $0x10] sm:$0xff]
    %v1249 = vld [vmem:[%s1245 + $0x18] sm:$0xff]
    %v1250 = vpack.c.bf16 %v1242, %v1242
    %1251 = vmatprep.subr.bf16.mxu0 %v550
    %1252 = vmatpush1.bf16.msra.mxu0 %v549
    %1253 = vmatprep.subr.bf16.mxu0 %v546
    %1254 = vmatpush1.bf16.msra.mxu0 %v545
    %1255 = vmatprep.subr.bf16.mxu0 %v542
    %1256 = vmatpush1.bf16.msra.mxu0 %v541
    %1257 = vmatprep.subr.bf16.mxu0 %v538
    %1258 = vmatpush1.bf16.msra.mxu0 %v537
    %1259 = vmatprep.subr.bf16.mxu0 %v534
    %1260 = vmatpush1.bf16.msra.mxu0 %v533
    %1261 = vmatprep.subr.bf16.mxu0 %v530
    %1262 = vmatpush1.bf16.msra.mxu0 %v529
    %1263 = vmatprep.subr.bf16.mxu0 %v526
    %1264 = vmatpush1.bf16.msra.mxu0 %v525
    %1265 = vmatprep.subr.bf16.mxu0 %v522
    %1266 = vmatpush1.bf16.msra.mxu0 %v521
    %1267 = vmatprep.subr.bf16.mxu0 0
    %1268 = vmatpush2.bf16.msra.mxu0 0
    %1269 = vmatprep.subr.bf16.mxu0 0
    %1270 = vmatpush2.bf16.msra.mxu0 0
    %1271 = vmatprep.subr.bf16.mxu0 0
    %1272 = vmatpush2.bf16.msra.mxu0 0
    %1273 = vmatprep.subr.bf16.mxu0 0
    %1274 = vmatpush2.bf16.msra.mxu0 0
    %1275 = vmatprep.subr.bf16.mxu0 0
    %1276 = vmatpush2.bf16.msra.mxu0 0
    %1277 = vmatprep.subr.bf16.mxu0 0
    %1278 = vmatpush2.bf16.msra.mxu0 0
    %1279 = vmatprep.subr.bf16.mxu0 0
    %1280 = vmatpush2.bf16.msra.mxu0 0
    %1281 = vmatprep.subr.bf16.mxu0 0
    %1282 = vmatpush2.bf16.msra.mxu0 0
    %1283 = vmatprep.mubr.bf16.mxu0 0
    %1284 = vmatmul.mubr.bf16.gmra.mxu0 %v1250
    %v1285 = vpop.f32.mrf.mxu0
    %v1286 = vadd.f32 %v1246, %v1285
    %v1287 = vpop.f32.mrf.mxu0
    %v1288 = vadd.f32 %v1247, %v1287
    %v1289 = vpop.f32.mrf.mxu0
    %v1290 = vpop.f32.mrf.mxu0
    %1291 = vdwg.mxu0
    %1292 = vmatprep.subr.bf16.mxu0 %v552
    %1293 = vmatpush1.bf16.msra.mxu0 %v551
    %1294 = vmatprep.subr.bf16.mxu0 %v548
    %1295 = vmatpush1.bf16.msra.mxu0 %v547
    %1296 = vmatprep.subr.bf16.mxu0 %v544
    %1297 = vmatpush1.bf16.msra.mxu0 %v543
    %1298 = vmatprep.subr.bf16.mxu0 %v540
    %1299 = vmatpush1.bf16.msra.mxu0 %v539
    %1300 = vmatprep.subr.bf16.mxu0 %v536
    %1301 = vmatpush1.bf16.msra.mxu0 %v535
    %1302 = vmatprep.subr.bf16.mxu0 %v532
    %1303 = vmatpush1.bf16.msra.mxu0 %v531
    %1304 = vmatprep.subr.bf16.mxu0 %v528
    %1305 = vmatpush1.bf16.msra.mxu0 %v527
    %1306 = vmatprep.subr.bf16.mxu0 %v524
    %1307 = vmatpush1.bf16.msra.mxu0 %v523
    %1308 = vmatprep.subr.bf16.mxu0 0
    %1309 = vmatpush2.bf16.msra.mxu0 0
    %1310 = vmatprep.subr.bf16.mxu0 0
    %1311 = vmatpush2.bf16.msra.mxu0 0
    %1312 = vmatprep.subr.bf16.mxu0 0
    %1313 = vmatpush2.bf16.msra.mxu0 0
    %1314 = vmatprep.subr.bf16.mxu0 0
    %1315 = vmatpush2.bf16.msra.mxu0 0
    %1316 = vmatprep.subr.bf16.mxu0 0
    %1317 = vmatpush2.bf16.msra.mxu0 0
    %1318 = vmatprep.subr.bf16.mxu0 0
    %1319 = vmatpush2.bf16.msra.mxu0 0
    %1320 = vmatprep.subr.bf16.mxu0 0
    %1321 = vmatpush2.bf16.msra.mxu0 0
    %1322 = vmatprep.subr.bf16.mxu0 0
    %1323 = vmatpush2.bf16.msra.mxu0 0
    %1324 = vmatprep.mubr.bf16.mxu0 0
    %1325 = vmatmul.mubr.bf16.gmra.mxu0 %v1250
    %v1326 = vpop.f32.mrf.mxu0
    %v1327 = vadd.f32 %v1248, %v1326
    %v1328 = vpop.f32.mrf.mxu0
    %v1329 = vadd.f32 %v1249, %v1328
    %v1330 = vpop.f32.mrf.mxu0
    %v1331 = vpop.f32.mrf.mxu0
    %1332 = vdwg.mxu0
    %v1333 = vmul.f32 %v1286, %v381
    %v1334 = vmul.f32 %v1288, %v382
    %v1335 = vmul.f32 %v1327, %v383
    %v1336 = vmul.f32 %v1329, %v384
    %v1337 = vtanh.pop %v1333
    %v1338 = vtanh.pop %v1334
    %v1339 = vtanh.pop %v1335
    %v1340 = vtanh.pop %v1336
    %v1341 = vmul.f32 %v1337, %v381
    %v1342 = vmul.f32 %v1338, %v382
    %v1343 = vmul.f32 %v1339, %v383
    %v1344 = vmul.f32 %v1340, %v384
    %v1345 = vadd.f32 %v1341, %v385
    %v1346 = vadd.f32 %v1342, %v386
    %v1347 = vadd.f32 %v1343, %v387
    %v1348 = vadd.f32 %v1344, %v388
    %v1349 = vmul.f32 %v1346, %v1240
    %v1350 = vmul.f32 %v1345, %v1347
    %v1351 = vadd.f32 %v1349, %v1350
    %v1352 = vtanh.pop %v1351
    %v1353 = vmul.f32 %v1348, %v1352
    %s1354 = smul.u32 8, 4
    %s1355 = smul.addr %s1354, 8
    %s1356 = scalar_lea.vmem [#allocation2], %s1355
    %v1357 = vld [vmem:[%s1356] sm:$0xff]
    %v1358 = vld [vmem:[%s1356 + $0x8] sm:$0xff]
    %v1359 = vld [vmem:[%s1356 + $0x10] sm:$0xff]
    %v1360 = vld [vmem:[%s1356 + $0x18] sm:$0xff]
    %v1361 = vpack.c.bf16 %v1353, %v1353
    %1362 = vmatprep.subr.bf16.mxu0 %v550
    %1363 = vmatpush1.bf16.msra.mxu0 %v549
    %1364 = vmatprep.subr.bf16.mxu0 %v546
    %1365 = vmatpush1.bf16.msra.mxu0 %v545
    %1366 = vmatprep.subr.bf16.mxu0 %v542
    %1367 = vmatpush1.bf16.msra.mxu0 %v541
    %1368 = vmatprep.subr.bf16.mxu0 %v538
    %1369 = vmatpush1.bf16.msra.mxu0 %v537
    %1370 = vmatprep.subr.bf16.mxu0 %v534
    %1371 = vmatpush1.bf16.msra.mxu0 %v533
    %1372 = vmatprep.subr.bf16.mxu0 %v530
    %1373 = vmatpush1.bf16.msra.mxu0 %v529
    %1374 = vmatprep.subr.bf16.mxu0 %v526
    %1375 = vmatpush1.bf16.msra.mxu0 %v525
    %1376 = vmatprep.subr.bf16.mxu0 %v522
    %1377 = vmatpush1.bf16.msra.mxu0 %v521
    %1378 = vmatprep.subr.bf16.mxu0 0
    %1379 = vmatpush2.bf16.msra.mxu0 0
    %1380 = vmatprep.subr.bf16.mxu0 0
    %1381 = vmatpush2.bf16.msra.mxu0 0
    %1382 = vmatprep.subr.bf16.mxu0 0
    %1383 = vmatpush2.bf16.msra.mxu0 0
    %1384 = vmatprep.subr.bf16.mxu0 0
    %1385 = vmatpush2.bf16.msra.mxu0 0
    %1386 = vmatprep.subr.bf16.mxu0 0
    %1387 = vmatpush2.bf16.msra.mxu0 0
    %1388 = vmatprep.subr.bf16.mxu0 0
    %1389 = vmatpush2.bf16.msra.mxu0 0
    %1390 = vmatprep.subr.bf16.mxu0 0
    %1391 = vmatpush2.bf16.msra.mxu0 0
    %1392 = vmatprep.subr.bf16.mxu0 0
    %1393 = vmatpush2.bf16.msra.mxu0 0
    %1394 = vmatprep.mubr.bf16.mxu0 0
    %1395 = vmatmul.mubr.bf16.gmra.mxu0 %v1361
    %v1396 = vpop.f32.mrf.mxu0
    %v1397 = vadd.f32 %v1357, %v1396
    %v1398 = vpop.f32.mrf.mxu0
    %v1399 = vadd.f32 %v1358, %v1398
    %v1400 = vpop.f32.mrf.mxu0
    %v1401 = vpop.f32.mrf.mxu0
    %1402 = vdwg.mxu0
    %1403 = vmatprep.subr.bf16.mxu0 %v552
    %1404 = vmatpush1.bf16.msra.mxu0 %v551
    %1405 = vmatprep.subr.bf16.mxu0 %v548
    %1406 = vmatpush1.bf16.msra.mxu0 %v547
    %1407 = vmatprep.subr.bf16.mxu0 %v544
    %1408 = vmatpush1.bf16.msra.mxu0 %v543
    %1409 = vmatprep.subr.bf16.mxu0 %v540
    %1410 = vmatpush1.bf16.msra.mxu0 %v539
    %1411 = vmatprep.subr.bf16.mxu0 %v536
    %1412 = vmatpush1.bf16.msra.mxu0 %v535
    %1413 = vmatprep.subr.bf16.mxu0 %v532
    %1414 = vmatpush1.bf16.msra.mxu0 %v531
    %1415 = vmatprep.subr.bf16.mxu0 %v528
    %1416 = vmatpush1.bf16.msra.mxu0 %v527
    %1417 = vmatprep.subr.bf16.mxu0 %v524
    %1418 = vmatpush1.bf16.msra.mxu0 %v523
    %1419 = vmatprep.subr.bf16.mxu0 0
    %1420 = vmatpush2.bf16.msra.mxu0 0
    %1421 = vmatprep.subr.bf16.mxu0 0
    %1422 = vmatpush2.bf16.msra.mxu0 0
    %1423 = vmatprep.subr.bf16.mxu0 0
    %1424 = vmatpush2.bf16.msra.mxu0 0
    %1425 = vmatprep.subr.bf16.mxu0 0
    %1426 = vmatpush2.bf16.msra.mxu0 0
    %1427 = vmatprep.subr.bf16.mxu0 0
    %1428 = vmatpush2.bf16.msra.mxu0 0
    %1429 = vmatprep.subr.bf16.mxu0 0
    %1430 = vmatpush2.bf16.msra.mxu0 0
    %1431 = vmatprep.subr.bf16.mxu0 0
    %1432 = vmatpush2.bf16.msra.mxu0 0
    %1433 = vmatprep.subr.bf16.mxu0 0
    %1434 = vmatpush2.bf16.msra.mxu0 0
    %1435 = vmatprep.mubr.bf16.mxu0 0
    %1436 = vmatmul.mubr.bf16.gmra.mxu0 %v1361
    %v1437 = vpop.f32.mrf.mxu0
    %v1438 = vadd.f32 %v1359, %v1437
    %v1439 = vpop.f32.mrf.mxu0
    %v1440 = vadd.f32 %v1360, %v1439
    %v1441 = vpop.f32.mrf.mxu0
    %v1442 = vpop.f32.mrf.mxu0
    %1443 = vdwg.mxu0
    %v1444 = vmul.f32 %v1397, %v381
    %v1445 = vmul.f32 %v1399, %v382
    %v1446 = vmul.f32 %v1438, %v383
    %v1447 = vmul.f32 %v1440, %v384
    %v1448 = vtanh.pop %v1444
    %v1449 = vtanh.pop %v1445
    %v1450 = vtanh.pop %v1446
    %v1451 = vtanh.pop %v1447
    %v1452 = vmul.f32 %v1448, %v381
    %v1453 = vmul.f32 %v1449, %v382
    %v1454 = vmul.f32 %v1450, %v383
    %v1455 = vmul.f32 %v1451, %v384
    %v1456 = vadd.f32 %v1452, %v385
    %v1457 = vadd.f32 %v1453, %v386
    %v1458 = vadd.f32 %v1454, %v387
    %v1459 = vadd.f32 %v1455, %v388
    %v1460 = vmul.f32 %v1457, %v1351
    %v1461 = vmul.f32 %v1456, %v1458
    %v1462 = vadd.f32 %v1460, %v1461
    %v1463 = vtanh.pop %v1462
    %v1464 = vmul.f32 %v1459, %v1463
    %v1465 = vld [vmem:[%s4] sm:$0x1]
    %v1467 = vlaneseq
    %v1468 = vshrl.u32 %v1467, 7
    %v1469 = vsub.s32 0, %v1468
    %v1470 = vrot.slane %v1465, %v1469
    %v1472 = vmul.f32 %v1464, %v1470
    %1473 = vadd.xlane.f32.xlu0 %v1472
    %v1474 = vpop.xlane.xlu0 %1473
    %v1475 = vld [vmem:[#allocation3] sm:$0x1]
    %v1477 = vlaneseq
    %v1478 = vshrl.u32 %v1477, 7
    %v1479 = vsub.s32 0, %v1478
    %v1480 = vrot.slane %v1475, %v1479
    %v1482 = vadd.f32 %v1474, %v1480
    %v1483 = vmul.f32 %v1482, 0.5
    %v1484 = vtanh.pop %v1483
    %v1485 = vmul.f32 %v1484, 0.5
    %v1486 = vadd.f32 %v1485, 0.5
    %vm1487 = vcmask 7168
    %1488 = vst.msk [vmem:[%s6] sm:$0xff] %vm1487, %v1486
    // Predicated region
    $region30: #{tpu_custom_call.1} parent=1 // pred_check
      _
    $region31: #{tpu_custom_call.1} parent=1 // pred_check_branch
      %1490 = sbr.rel (0) target = $region33
    $region32: #{tpu_custom_call.1} parent=1 // pred_region
      _
    $region33: #{tpu_custom_call.1} parent=1 // pred_fallthru
      _
    // Predicated region
    $region34: #{tpu_custom_call.1} parent=1 // pred_check
      _
    $region35: #{tpu_custom_call.1} parent=1 // pred_check_branch
      %1492 = sbr.rel (0) target = $region37
    $region36: #{tpu_custom_call.1} parent=1 // pred_region
      _
    $region37: #{tpu_custom_call.1} parent=1 // pred_fallthru
      _
    %1493 = vsyncpa [#allocation5], 1

</llo_original>
